<compile_context>
chip_gen: v7x
topology: tpu7x:2x2x1
jax: 0.10.0
libtpu: 0.0.40
codegen_flags: <defaults>
</compile_context>

<pallas_src>
import functools

import jax
import jax.numpy as jnp
from jax.experimental import pallas as pl
from jax.experimental.pallas import tpu as pltpu

EPS = 1e-5                       # nn.BatchNorm2d default eps
MATMUL_DTYPE = jnp.bfloat16      # MXU-native operand dtype (f32 accumulation)
VMEM_LIMIT = 32 * 1024 * 1024    # safe on v5e/v6e (128 MiB) and v7x (64 MiB)


def _pick_tile_h(H, W):
    """Row-tile height: divides H, respects the 8-sublane alignment rule
    (tile % 8 == 0 or tile == H) and aims for a 128..1024-row matmul M-tile
    (multiples of 128 feed the MXU efficiently on v5e, 256 on v6e/v7x)."""
    cands = [t for t in range(1, H + 1) if H % t == 0 and (t % 8 == 0 or t == H)]
    good = [t for t in cands if t < H and 128 <= t * W <= 1024]
    if good:
        return min(good)
    return min(cands, key=lambda t: abs(t * W - 512))


def _conv_stats_kernel(xw_ref, w_ref, y_ref, st_ref, *, TH, W, Cin, Cout):
    """3x3 'same' conv (stride 1) on one (TILE_H+2)-row halo window, computed as
    a single K=9*Cin MXU matmul, plus per-tile BatchNorm partial statistics."""
    xw = xw_ref[...].astype(jnp.float32)               # (TH+2, W+2, Cin)
    # im2col: 9 shifted taps -> (TH*W, 9*Cin) patch matrix -> one MXU pass.
    taps = [xw[dy:dy + TH, dx:dx + W, :].reshape(TH * W, Cin)
            for dy in range(3) for dx in range(3)]
    patches = jnp.concatenate(taps, axis=-1).astype(MATMUL_DTYPE)
    acc = jnp.dot(patches, w_ref[...], preferred_element_type=jnp.float32)
    y_ref[...] = acc.reshape(TH, W, Cout)              # raw conv output (f32)
    # Partial BN statistics for this tile; reduced across tiles in the wrapper.
    st_ref[0:1, :] = jnp.sum(acc, axis=0, keepdims=True)
    st_ref[1:2, :] = jnp.sum(acc * acc, axis=0, keepdims=True)


def _bn_act_kernel(y_ref, scale_ref, shift_ref, o_ref):
    # Lane-dense (TILE_H, W*C) elementwise: y*scale + shift, ReLU.
    o_ref[...] = jnp.maximum(y_ref[...] * scale_ref[...] + shift_ref[...], 0.0)


def _bn_add_act_kernel(y_ref, scale_ref, shift_ref, res_ref, o_ref):
    o_ref[...] = jnp.maximum(
        y_ref[...] * scale_ref[...] + shift_ref[...] + res_ref[...], 0.0)


def _stage(x_nhwc, w_hwio, gamma, beta, residual=None):
    """conv3x3 (pad=1, stride=1, bias=False) -> BatchNorm (batch statistics)
    [-> + residual] -> ReLU, as two row-tiled pallas_calls."""
    N, H, W, Cin = x_nhwc.shape
    Cout = w_hwio.shape[-1]
    TH = _pick_tile_h(H, W)
    HT = H // TH

    # ---- pass A input: overlapping (TILE_H+2)-row halo windows, bf16 ---------
    # TODO(synk): build the halo in-kernel (pl.ANY + pltpu.make_async_copy of
    # TILE_H+2 rows) to drop this wrapper-side pad/window HBM round trip.
    xp = jnp.pad(x_nhwc, ((0, 0), (1, 1), (1, 1), (0, 0))).astype(MATMUL_DTYPE)
    win = jnp.stack([xp[:, j * TH:j * TH + TH + 2] for j in range(HT)], axis=1)
    # win: (N, HT, TH+2, W+2, Cin);  weights flattened to (9*Cin, Cout), rows
    # ordered (ky, kx, ci) to match the tap concatenation order above.
    w9 = w_hwio.reshape(9 * Cin, Cout).astype(MATMUL_DTYPE)

    conv_kernel = functools.partial(_conv_stats_kernel, TH=TH, W=W, Cin=Cin, Cout=Cout)
    conv_out, stats = pl.pallas_call(
        conv_kernel,
        grid=(N, HT),
        in_specs=[
            pl.BlockSpec((None, None, TH + 2, W + 2, Cin),
                         lambda n, j: (n, j, 0, 0, 0)),
            pl.BlockSpec((9 * Cin, Cout), lambda n, j: (0, 0)),  # stays resident
        ],
        out_specs=[
            pl.BlockSpec((None, TH, W, Cout), lambda n, j: (n, j, 0, 0)),
            pl.BlockSpec((None, None, 2, Cout), lambda n, j: (n, j, 0, 0)),
        ],
        out_shape=[
            jax.ShapeDtypeStruct((N, H, W, Cout), jnp.float32),
            jax.ShapeDtypeStruct((N, HT, 2, Cout), jnp.float32),
        ],
        compiler_params=pltpu.CompilerParams(
            dimension_semantics=("parallel", "parallel"),
            vmem_limit_bytes=VMEM_LIMIT),
    )(win, w9)

    # ---- exact BatchNorm over (N, H, W) from the cross-tile partial sums -----
    cnt = jnp.float32(N * H * W)
    s = jnp.sum(stats, axis=(0, 1))                       # (2, Cout)
    mean = s[0] / cnt
    var = jnp.maximum(s[1] / cnt - mean * mean, 0.0)      # biased / training-mode
    scale_c = gamma.astype(jnp.float32) * jax.lax.rsqrt(var + EPS)
    shift_c = beta.astype(jnp.float32) - mean * scale_c
    # Per-channel affine tiled to the lane-dense (W*Cout) layout of pass B.
    scale = jnp.tile(scale_c, W).reshape(1, W * Cout)
    shift = jnp.tile(shift_c, W).reshape(1, W * Cout)

    # ---- pass B: lane-dense normalize (+ residual) + ReLU --------------------
    y2 = conv_out.reshape(N, H, W * Cout)                 # free row-major merge
    row_spec = pl.BlockSpec((None, TH, W * Cout), lambda n, j: (n, j, 0))
    vec_spec = pl.BlockSpec((1, W * Cout), lambda n, j: (0, 0))
    if residual is None:
        kernel, ins = _bn_act_kernel, (y2, scale, shift)
        in_specs = [row_spec, vec_spec, vec_spec]
    else:
        res2 = residual.reshape(N, H, W * Cout).astype(jnp.float32)
        kernel, ins = _bn_add_act_kernel, (y2, scale, shift, res2)
        in_specs = [row_spec, vec_spec, vec_spec, row_spec]

    out = pl.pallas_call(
        kernel,
        grid=(N, HT),
        in_specs=in_specs,
        out_specs=row_spec,
        out_shape=jax.ShapeDtypeStruct((N, H, W * Cout), jnp.float32),
        compiler_params=pltpu.CompilerParams(
            dimension_semantics=("parallel", "parallel"),
            vmem_limit_bytes=VMEM_LIMIT),
    )(*ins)
    return out.reshape(N, H, W, Cout)


def basic_block_forward(x_nchw, params):
    """BasicBlock.forward (stride=1, downsample=None). NCHW in / NCHW out."""
    x = jnp.transpose(x_nchw, (0, 2, 3, 1)).astype(jnp.float32)        # -> NHWC
    out = _stage(x, params["w1"], params["gamma1"], params["beta1"])           # conv1+bn1+relu
    out = _stage(out, params["w2"], params["gamma2"], params["beta2"], residual=x)  # conv2+bn2+add+relu
    return jnp.transpose(out, (0, 3, 1, 2))                            # -> NCHW


def _reference(x_nchw, params):
    """Pure-JAX reference mirroring the PyTorch forward and the kernel's dtype
    policy (bf16 conv operands, f32 accumulation / BN / residual / ReLU)."""
    x = jnp.transpose(x_nchw, (0, 2, 3, 1)).astype(jnp.float32)

    def conv(y, w):
        return jax.lax.conv_general_dilated(
            y.astype(MATMUL_DTYPE), w.astype(MATMUL_DTYPE),
            window_strides=(1, 1), padding="SAME",
            dimension_numbers=("NHWC", "HWIO", "NHWC"),
            preferred_element_type=jnp.float32)

    def bn(y, g, b):
        mean = jnp.mean(y, axis=(0, 1, 2), keepdims=True)
        var = jnp.mean((y - mean) ** 2, axis=(0, 1, 2), keepdims=True)
        return (y - mean) * jax.lax.rsqrt(var + EPS) * g + b

    out = jax.nn.relu(bn(conv(x, params["w1"]), params["gamma1"], params["beta1"]))
    out = jax.nn.relu(bn(conv(out, params["w2"]), params["gamma2"], params["beta2"]) + x)
    return jnp.transpose(out, (0, 3, 1, 2))


if __name__ == "__main__":
    # Shapes consistent with BasicBlock(in_channels=8, out_channels=8, stride=1).
    N, C, H, W = 2, 8, 16, 16
    key = jax.random.PRNGKey(0)
    kx, kw1, kw2, kg1, kb1, kg2, kb2 = jax.random.split(key, 7)

    x = jax.random.normal(kx, (N, C, H, W), jnp.float32)
    params = {
        "w1": 0.1 * jax.random.normal(kw1, (3, 3, C, C), jnp.float32),   # HWIO
        "w2": 0.1 * jax.random.normal(kw2, (3, 3, C, C), jnp.float32),   # HWIO
        "gamma1": 1.0 + 0.1 * jax.random.normal(kg1, (C,), jnp.float32),
        "beta1": 0.1 * jax.random.normal(kb1, (C,), jnp.float32),
        "gamma2": 1.0 + 0.1 * jax.random.normal(kg2, (C,), jnp.float32),
        "beta2": 0.1 * jax.random.normal(kb2, (C,), jnp.float32),
    }

    out = jax.block_until_ready(jax.jit(basic_block_forward)(x, params))
    ref = jax.block_until_ready(_reference(x, params))

    assert out.shape == (N, C, H, W), out.shape
    # Reference uses the same bf16 conv operands, so the residual difference is
    # only f32 accumulation order / BN-formula noise (expected ~1e-4..1e-3).
    max_err = float(jnp.max(jnp.abs(out - ref)))
    assert max_err < 1e-2, f"max abs error {max_err}"
    print("KERNEL_OK")
</pallas_src>

<mosaic_0001>
module attributes {stable_mosaic.version = 11 : i64} {
  func.func @_conv_stats_kernel(%arg0: i32, %arg1: i32, %arg2: memref<1x1x10x18x8xbf16, #tpu.memory_space<vmem>>, %arg3: memref<72x8xbf16, #tpu.memory_space<vmem>>, %arg4: memref<1x8x16x8xf32, #tpu.memory_space<vmem>>, %arg5: memref<1x1x2x8xf32, #tpu.memory_space<vmem>>) attributes {dimension_semantics = [#tpu.dimension_semantics<parallel>, #tpu.dimension_semantics<parallel>], iteration_bounds = array<i64: 2, 2>, scalar_prefetch = 0 : i64, scratch_operands = 0 : i64, tpu.core_type = #tpu.core_type<tc>, window_params = [{transform_indices = @transform_0, window_bounds = array<i64: 1, 1, 10, 18, 8>}, {pipeline_mode = #tpu.pipeline_mode<synchronous>, transform_indices = @transform_1, window_bounds = array<i64: 72, 8>}, {transform_indices = @transform_2, window_bounds = array<i64: 1, 8, 16, 8>}, {transform_indices = @transform_3, window_bounds = array<i64: 1, 1, 2, 8>}]} {
    %c0 = arith.constant 0 : index
    %c0_0 = arith.constant 0 : index
    %c0_1 = arith.constant 0 : index
    %c0_2 = arith.constant 0 : index
    %c0_3 = arith.constant 0 : index
    %0 = vector.load %arg2[%c0, %c0_0, %c0_1, %c0_2, %c0_3] : memref<1x1x10x18x8xbf16, #tpu.memory_space<vmem>>, vector<1x1x10x18x8xbf16>
    %1 = vector.shape_cast %0 : vector<1x1x10x18x8xbf16> to vector<10x18x8xbf16>
    %2 = arith.extf %1 : vector<10x18x8xbf16> to vector<10x18x8xf32>
    %3 = vector.extract_strided_slice %2 {offsets = [0, 0, 0], sizes = [8, 16, 8], strides = [1, 1, 1]} : vector<10x18x8xf32> to vector<8x16x8xf32>
    %4 = vector.shape_cast %3 : vector<8x16x8xf32> to vector<128x8xf32>
    %5 = vector.extract_strided_slice %2 {offsets = [0, 1, 0], sizes = [8, 16, 8], strides = [1, 1, 1]} : vector<10x18x8xf32> to vector<8x16x8xf32>
    %6 = vector.shape_cast %5 : vector<8x16x8xf32> to vector<128x8xf32>
    %7 = vector.extract_strided_slice %2 {offsets = [0, 2, 0], sizes = [8, 16, 8], strides = [1, 1, 1]} : vector<10x18x8xf32> to vector<8x16x8xf32>
    %8 = vector.shape_cast %7 : vector<8x16x8xf32> to vector<128x8xf32>
    %9 = vector.extract_strided_slice %2 {offsets = [1, 0, 0], sizes = [8, 16, 8], strides = [1, 1, 1]} : vector<10x18x8xf32> to vector<8x16x8xf32>
    %10 = vector.shape_cast %9 : vector<8x16x8xf32> to vector<128x8xf32>
    %11 = vector.extract_strided_slice %2 {offsets = [1, 1, 0], sizes = [8, 16, 8], strides = [1, 1, 1]} : vector<10x18x8xf32> to vector<8x16x8xf32>
    %12 = vector.shape_cast %11 : vector<8x16x8xf32> to vector<128x8xf32>
    %13 = vector.extract_strided_slice %2 {offsets = [1, 2, 0], sizes = [8, 16, 8], strides = [1, 1, 1]} : vector<10x18x8xf32> to vector<8x16x8xf32>
    %14 = vector.shape_cast %13 : vector<8x16x8xf32> to vector<128x8xf32>
    %15 = vector.extract_strided_slice %2 {offsets = [2, 0, 0], sizes = [8, 16, 8], strides = [1, 1, 1]} : vector<10x18x8xf32> to vector<8x16x8xf32>
    %16 = vector.shape_cast %15 : vector<8x16x8xf32> to vector<128x8xf32>
    %17 = vector.extract_strided_slice %2 {offsets = [2, 1, 0], sizes = [8, 16, 8], strides = [1, 1, 1]} : vector<10x18x8xf32> to vector<8x16x8xf32>
    %18 = vector.shape_cast %17 : vector<8x16x8xf32> to vector<128x8xf32>
    %19 = vector.extract_strided_slice %2 {offsets = [2, 2, 0], sizes = [8, 16, 8], strides = [1, 1, 1]} : vector<10x18x8xf32> to vector<8x16x8xf32>
    %20 = vector.shape_cast %19 : vector<8x16x8xf32> to vector<128x8xf32>
    %21 = tpu.concatenate %4, %6, %8, %10, %12, %14, %16, %18, %20 in 1 : vector<128x8xf32>, vector<128x8xf32>, vector<128x8xf32>, vector<128x8xf32>, vector<128x8xf32>, vector<128x8xf32>, vector<128x8xf32>, vector<128x8xf32>, vector<128x8xf32> -> vector<128x72xf32>
    %22 = arith.truncf %21 : vector<128x72xf32> to vector<128x72xbf16>
    %c0_4 = arith.constant 0 : index
    %c0_5 = arith.constant 0 : index
    %23 = vector.load %arg3[%c0_4, %c0_5] : memref<72x8xbf16, #tpu.memory_space<vmem>>, vector<72x8xbf16>
    %cst = arith.constant dense<0.000000e+00> : vector<128x8xf32>
    %24 = tpu.matmul %22, %23, %cst {dimension_numbers = #tpu.dot_dimension_numbers<[1], [0], [0], [1], [0, 0, 1, 1], [], []>} : vector<128x72xbf16>, vector<72x8xbf16>, vector<128x8xf32> -> vector<128x8xf32>
    %25 = vector.shape_cast %24 : vector<128x8xf32> to vector<8x16x8xf32>
    %c0_6 = arith.constant 0 : index
    %c0_7 = arith.constant 0 : index
    %c0_8 = arith.constant 0 : index
    %c0_9 = arith.constant 0 : index
    %26 = vector.load %arg4[%c0_6, %c0_7, %c0_8, %c0_9] : memref<1x8x16x8xf32, #tpu.memory_space<vmem>>, vector<1x8x16x8xf32>
    %27 = vector.shape_cast %26 : vector<1x8x16x8xf32> to vector<8x16x8xf32>
    %28 = vector.shape_cast %25 : vector<8x16x8xf32> to vector<1x8x16x8xf32>
    tpu.vector_store %arg4[%c0_6, %c0_7, %c0_8, %c0_9], %28 {strides = array<i32>} : memref<1x8x16x8xf32, #tpu.memory_space<vmem>>, vector<1x8x16x8xf32>,
    %cst_10 = arith.constant dense<0.000000e+00> : vector<8xf32>
    %29 = vector.multi_reduction <add>, %24, %cst_10 [0] : vector<128x8xf32> to vector<8xf32>
    %30 = vector.shape_cast %29 : vector<8xf32> to vector<1x8xf32>
    %c0_11 = arith.constant 0 : index
    %c0_12 = arith.constant 0 : index
    %c0_13 = arith.constant 0 : index
    %c0_14 = arith.constant 0 : index
    %31 = vector.load %arg5[%c0_11, %c0_12, %c0_13, %c0_14] : memref<1x1x2x8xf32, #tpu.memory_space<vmem>>, vector<1x1x1x8xf32>
    %32 = vector.shape_cast %31 : vector<1x1x1x8xf32> to vector<1x8xf32>
    %33 = vector.shape_cast %30 : vector<1x8xf32> to vector<1x1x1x8xf32>
    tpu.vector_store %arg5[%c0_11, %c0_12, %c0_13, %c0_14], %33 {strides = array<i32>} : memref<1x1x2x8xf32, #tpu.memory_space<vmem>>, vector<1x1x1x8xf32>,
    %34 = arith.mulf %24, %24 : vector<128x8xf32>
    %cst_15 = arith.constant dense<0.000000e+00> : vector<8xf32>
    %35 = vector.multi_reduction <add>, %34, %cst_15 [0] : vector<128x8xf32> to vector<8xf32>
    %36 = vector.shape_cast %35 : vector<8xf32> to vector<1x8xf32>
    %c0_16 = arith.constant 0 : index
    %c0_17 = arith.constant 0 : index
    %c1 = arith.constant 1 : index
    %c0_18 = arith.constant 0 : index
    %37 = vector.load %arg5[%c0_16, %c0_17, %c1, %c0_18] : memref<1x1x2x8xf32, #tpu.memory_space<vmem>>, vector<1x1x1x8xf32>
    %38 = vector.shape_cast %37 : vector<1x1x1x8xf32> to vector<1x8xf32>
    %39 = vector.shape_cast %36 : vector<1x8xf32> to vector<1x1x1x8xf32>
    tpu.vector_store %arg5[%c0_16, %c0_17, %c1, %c0_18], %39 {strides = array<i32>} : memref<1x1x2x8xf32, #tpu.memory_space<vmem>>, vector<1x1x1x8xf32>,
    return
  }
  func.func @transform_0(%arg0: i32, %arg1: i32) -> (i32, i32, i32, i32, i32) {
    %c0_i32 = arith.constant 0 : i32
    %c0_i32_0 = arith.constant 0 : i32
    %c0_i32_1 = arith.constant 0 : i32
    %c0_i32_2 = arith.constant 0 : i32
    return %arg0, %arg1, %c0_i32, %c0_i32_0, %c0_i32_1 : i32, i32, i32, i32, i32
  }
  func.func @transform_1(%arg0: i32, %arg1: i32) -> (i32, i32) {
    %c0_i32 = arith.constant 0 : i32
    %c0_i32_0 = arith.constant 0 : i32
    %c0_i32_1 = arith.constant 0 : i32
    return %c0_i32, %c0_i32_0 : i32, i32
  }
  func.func @transform_2(%arg0: i32, %arg1: i32) -> (i32, i32, i32, i32) {
    %c0_i32 = arith.constant 0 : i32
    %c0_i32_0 = arith.constant 0 : i32
    %c0_i32_1 = arith.constant 0 : i32
    return %arg0, %arg1, %c0_i32, %c0_i32_0 : i32, i32, i32, i32
  }
  func.func @transform_3(%arg0: i32, %arg1: i32) -> (i32, i32, i32, i32) {
    %c0_i32 = arith.constant 0 : i32
    %c0_i32_0 = arith.constant 0 : i32
    %c0_i32_1 = arith.constant 0 : i32
    return %arg0, %arg1, %c0_i32, %c0_i32_0 : i32, i32, i32, i32
  }
}

module attributes {stable_mosaic.version = 11 : i64} {
  func.func @_bn_act_kernel(%arg0: i32, %arg1: i32, %arg2: memref<1x8x128xf32, #tpu.memory_space<vmem>>, %arg3: memref<1x128xf32, #tpu.memory_space<vmem>>, %arg4: memref<1x128xf32, #tpu.memory_space<vmem>>, %arg5: memref<1x8x128xf32, #tpu.memory_space<vmem>>) attributes {dimension_semantics = [#tpu.dimension_semantics<parallel>, #tpu.dimension_semantics<parallel>], iteration_bounds = array<i64: 2, 2>, scalar_prefetch = 0 : i64, scratch_operands = 0 : i64, tpu.core_type = #tpu.core_type<tc>, window_params = [{transform_indices = @transform_0, window_bounds = array<i64: 1, 8, 128>}, {pipeline_mode = #tpu.pipeline_mode<synchronous>, transform_indices = @transform_1, window_bounds = array<i64: 1, 128>}, {pipeline_mode = #tpu.pipeline_mode<synchronous>, transform_indices = @transform_2, window_bounds = array<i64: 1, 128>}, {transform_indices = @transform_3, window_bounds = array<i64: 1, 8, 128>}]} {
    %c0 = arith.constant 0 : index
    %c0_0 = arith.constant 0 : index
    %c0_1 = arith.constant 0 : index
    %0 = vector.load %arg2[%c0, %c0_0, %c0_1] : memref<1x8x128xf32, #tpu.memory_space<vmem>>, vector<1x8x128xf32>
    %1 = vector.shape_cast %0 : vector<1x8x128xf32> to vector<8x128xf32>
    %c0_2 = arith.constant 0 : index
    %c0_3 = arith.constant 0 : index
    %2 = vector.load %arg3[%c0_2, %c0_3] : memref<1x128xf32, #tpu.memory_space<vmem>>, vector<1x128xf32>
    %3 = vector.broadcast %2 : vector<1x128xf32> to vector<8x128xf32>
    %4 = arith.mulf %1, %3 : vector<8x128xf32>
    %c0_4 = arith.constant 0 : index
    %c0_5 = arith.constant 0 : index
    %5 = vector.load %arg4[%c0_4, %c0_5] : memref<1x128xf32, #tpu.memory_space<vmem>>, vector<1x128xf32>
    %6 = vector.broadcast %5 : vector<1x128xf32> to vector<8x128xf32>
    %7 = arith.addf %4, %6 : vector<8x128xf32>
    %cst = arith.constant 0.000000e+00 : f32
    %8 = vector.broadcast %cst : f32 to vector<8x128xf32>
    %9 = arith.maximumf %7, %8 : vector<8x128xf32>
    %c0_6 = arith.constant 0 : index
    %c0_7 = arith.constant 0 : index
    %c0_8 = arith.constant 0 : index
    %10 = vector.load %arg5[%c0_6, %c0_7, %c0_8] : memref<1x8x128xf32, #tpu.memory_space<vmem>>, vector<1x8x128xf32>
    %11 = vector.shape_cast %10 : vector<1x8x128xf32> to vector<8x128xf32>
    %12 = vector.shape_cast %9 : vector<8x128xf32> to vector<1x8x128xf32>
    tpu.vector_store %arg5[%c0_6, %c0_7, %c0_8], %12 {strides = array<i32>} : memref<1x8x128xf32, #tpu.memory_space<vmem>>, vector<1x8x128xf32>,
    return
  }
  func.func @transform_0(%arg0: i32, %arg1: i32) -> (i32, i32, i32) {
    %c0_i32 = arith.constant 0 : i32
    %c0_i32_0 = arith.constant 0 : i32
    return %arg0, %arg1, %c0_i32 : i32, i32, i32
  }
  func.func @transform_1(%arg0: i32, %arg1: i32) -> (i32, i32) {
    %c0_i32 = arith.constant 0 : i32
    %c0_i32_0 = arith.constant 0 : i32
    %c0_i32_1 = arith.constant 0 : i32
    return %c0_i32, %c0_i32_0 : i32, i32
  }
  func.func @transform_2(%arg0: i32, %arg1: i32) -> (i32, i32) {
    %c0_i32 = arith.constant 0 : i32
    %c0_i32_0 = arith.constant 0 : i32
    %c0_i32_1 = arith.constant 0 : i32
    return %c0_i32, %c0_i32_0 : i32, i32
  }
  func.func @transform_3(%arg0: i32, %arg1: i32) -> (i32, i32, i32) {
    %c0_i32 = arith.constant 0 : i32
    %c0_i32_0 = arith.constant 0 : i32
    return %arg0, %arg1, %c0_i32 : i32, i32, i32
  }
}

module attributes {stable_mosaic.version = 11 : i64} {
  func.func @_bn_add_act_kernel(%arg0: i32, %arg1: i32, %arg2: memref<1x8x128xf32, #tpu.memory_space<vmem>>, %arg3: memref<1x128xf32, #tpu.memory_space<vmem>>, %arg4: memref<1x128xf32, #tpu.memory_space<vmem>>, %arg5: memref<1x8x128xf32, #tpu.memory_space<vmem>>, %arg6: memref<1x8x128xf32, #tpu.memory_space<vmem>>) attributes {dimension_semantics = [#tpu.dimension_semantics<parallel>, #tpu.dimension_semantics<parallel>], iteration_bounds = array<i64: 2, 2>, scalar_prefetch = 0 : i64, scratch_operands = 0 : i64, tpu.core_type = #tpu.core_type<tc>, window_params = [{transform_indices = @transform_0, window_bounds = array<i64: 1, 8, 128>}, {pipeline_mode = #tpu.pipeline_mode<synchronous>, transform_indices = @transform_1, window_bounds = array<i64: 1, 128>}, {pipeline_mode = #tpu.pipeline_mode<synchronous>, transform_indices = @transform_2, window_bounds = array<i64: 1, 128>}, {transform_indices = @transform_3, window_bounds = array<i64: 1, 8, 128>}, {transform_indices = @transform_4, window_bounds = array<i64: 1, 8, 128>}]} {
    %c0 = arith.constant 0 : index
    %c0_0 = arith.constant 0 : index
    %c0_1 = arith.constant 0 : index
    %0 = vector.load %arg2[%c0, %c0_0, %c0_1] : memref<1x8x128xf32, #tpu.memory_space<vmem>>, vector<1x8x128xf32>
    %1 = vector.shape_cast %0 : vector<1x8x128xf32> to vector<8x128xf32>
    %c0_2 = arith.constant 0 : index
    %c0_3 = arith.constant 0 : index
    %2 = vector.load %arg3[%c0_2, %c0_3] : memref<1x128xf32, #tpu.memory_space<vmem>>, vector<1x128xf32>
    %3 = vector.broadcast %2 : vector<1x128xf32> to vector<8x128xf32>
    %4 = arith.mulf %1, %3 : vector<8x128xf32>
    %c0_4 = arith.constant 0 : index
    %c0_5 = arith.constant 0 : index
    %5 = vector.load %arg4[%c0_4, %c0_5] : memref<1x128xf32, #tpu.memory_space<vmem>>, vector<1x128xf32>
    %6 = vector.broadcast %5 : vector<1x128xf32> to vector<8x128xf32>
    %7 = arith.addf %4, %6 : vector<8x128xf32>
    %c0_6 = arith.constant 0 : index
    %c0_7 = arith.constant 0 : index
    %c0_8 = arith.constant 0 : index
    %8 = vector.load %arg5[%c0_6, %c0_7, %c0_8] : memref<1x8x128xf32, #tpu.memory_space<vmem>>, vector<1x8x128xf32>
    %9 = vector.shape_cast %8 : vector<1x8x128xf32> to vector<8x128xf32>
    %10 = arith.addf %7, %9 : vector<8x128xf32>
    %cst = arith.constant 0.000000e+00 : f32
    %11 = vector.broadcast %cst : f32 to vector<8x128xf32>
    %12 = arith.maximumf %10, %11 : vector<8x128xf32>
    %c0_9 = arith.constant 0 : index
    %c0_10 = arith.constant 0 : index
    %c0_11 = arith.constant 0 : index
    %13 = vector.load %arg6[%c0_9, %c0_10, %c0_11] : memref<1x8x128xf32, #tpu.memory_space<vmem>>, vector<1x8x128xf32>
    %14 = vector.shape_cast %13 : vector<1x8x128xf32> to vector<8x128xf32>
    %15 = vector.shape_cast %12 : vector<8x128xf32> to vector<1x8x128xf32>
    tpu.vector_store %arg6[%c0_9, %c0_10, %c0_11], %15 {strides = array<i32>} : memref<1x8x128xf32, #tpu.memory_space<vmem>>, vector<1x8x128xf32>,
    return
  }
  func.func @transform_0(%arg0: i32, %arg1: i32) -> (i32, i32, i32) {
    %c0_i32 = arith.constant 0 : i32
    %c0_i32_0 = arith.constant 0 : i32
    return %arg0, %arg1, %c0_i32 : i32, i32, i32
  }
  func.func @transform_1(%arg0: i32, %arg1: i32) -> (i32, i32) {
    %c0_i32 = arith.constant 0 : i32
    %c0_i32_0 = arith.constant 0 : i32
    %c0_i32_1 = arith.constant 0 : i32
    return %c0_i32, %c0_i32_0 : i32, i32
  }
  func.func @transform_2(%arg0: i32, %arg1: i32) -> (i32, i32) {
    %c0_i32 = arith.constant 0 : i32
    %c0_i32_0 = arith.constant 0 : i32
    %c0_i32_1 = arith.constant 0 : i32
    return %c0_i32, %c0_i32_0 : i32, i32
  }
  func.func @transform_3(%arg0: i32, %arg1: i32) -> (i32, i32, i32) {
    %c0_i32 = arith.constant 0 : i32
    %c0_i32_0 = arith.constant 0 : i32
    return %arg0, %arg1, %c0_i32 : i32, i32, i32
  }
  func.func @transform_4(%arg0: i32, %arg1: i32) -> (i32, i32, i32) {
    %c0_i32 = arith.constant 0 : i32
    %c0_i32_0 = arith.constant 0 : i32
    return %arg0, %arg1, %c0_i32 : i32, i32, i32
  }
}

</mosaic_0001>

<llo_original>
// kernel: tile.23
$region0: #{tile.23}
  #allocation0 [shape = 's32[1]{0}', space=sflag, size = 0x4, scoped, tag = 'scoped memory for tile.23']
  %s0 = inlined_call_operand.vmem [shape: f32[8], index: 0, kind: input, shape index: {}]
  %s1 = inlined_call_operand.vmem [shape: f32[16,8], index: 1, kind: output, shape index: {}]
  // Predicated region
  $region2: #{tile.23} parent=0 // pred_check
    _
  $region3: #{tile.23} parent=0 // pred_check_branch
    %3 = sbr.rel (0) target = $region5
  $region4: #{tile.23} parent=0 // pred_region
    _
  $region5: #{tile.23} parent=0 // pred_fallthru
    _
  %v4 = vld [vmem:[%s0] ss:$0 sm:$0xff]
  %5 = vst [vmem:[%s1] sm:$0xff] %v4
  %s6 = scalar_lea.vmem %s1, 8
  %7 = vst [vmem:[%s6] sm:$0xff] %v4

// kernel: tile.24
$region0: #{tile.24}
  %s0 = inlined_call_operand.vmem [shape: f32[16,8], index: 0, kind: input, shape index: {}]
  %s1 = inlined_call_operand.vmem [shape: f32[1,128], index: 1, kind: output, shape index: {}]
  $region1: #{tile.24} parent=0
    #allocation0 [shape = 'u8[4096]{0}', space=vmem, size = 0x1000, scoped, tag = 'scoped mem for output reshape']
    %v2 = vld [vmem:[%s0] sm:$0x1]
    %vm3 = vcmask 64512
    %4 = vst.msk [vmem:[#allocation0] sm:$0x1] %vm3, %v2
    %s5 = scalar_lea.vmem %s0, 15
    %v6 = vld [vmem:[%s5] sm:$0x1]
    %7 = vrot.lane.b32.xlu0 %v6, 120
    %v8 = vpop.permute.xlu0 %7
    %vm9 = vcmask 1048512
    %10 = vst.msk [vmem:[#allocation0] sm:$0x1] %vm9, %v8
    %s11 = scalar_lea.vmem %s0, 14
    %v12 = vld [vmem:[%s11] sm:$0x1]
    %13 = vrot.lane.b32.xlu0 %v12, 112
    %v14 = vpop.permute.xlu0 %13
    %vm15 = vcmask 982912
    %16 = vst.msk [vmem:[#allocation0] sm:$0x1] %vm15, %v14
    %s17 = scalar_lea.vmem %s0, 13
    %v18 = vld [vmem:[%s17] sm:$0x1]
    %19 = vrot.lane.b32.xlu0 %v18, 104
    %v20 = vpop.permute.xlu0 %19
    %vm21 = vcmask 917312
    %22 = vst.msk [vmem:[#allocation0] sm:$0x1] %vm21, %v20
    %s23 = scalar_lea.vmem %s0, 12
    %v24 = vld [vmem:[%s23] sm:$0x1]
    %25 = vrot.lane.b32.xlu0 %v24, 96
    %v26 = vpop.permute.xlu0 %25
    %vm27 = vcmask 851712
    %28 = vst.msk [vmem:[#allocation0] sm:$0x1] %vm27, %v26
    %s29 = scalar_lea.vmem %s0, 11
    %v30 = vld [vmem:[%s29] sm:$0x1]
    %31 = vrot.lane.b32.xlu0 %v30, 88
    %v32 = vpop.permute.xlu0 %31
    %vm33 = vcmask 786112
    %34 = vst.msk [vmem:[#allocation0] sm:$0x1] %vm33, %v32
    %s35 = scalar_lea.vmem %s0, 10
    %v36 = vld [vmem:[%s35] sm:$0x1]
    %37 = vrot.lane.b32.xlu0 %v36, 80
    %v38 = vpop.permute.xlu0 %37
    %vm39 = vcmask 720512
    %40 = vst.msk [vmem:[#allocation0] sm:$0x1] %vm39, %v38
    %s41 = scalar_lea.vmem %s0, 9
    %v42 = vld [vmem:[%s41] sm:$0x1]
    %43 = vrot.lane.b32.xlu0 %v42, 72
    %v44 = vpop.permute.xlu0 %43
    %vm45 = vcmask 654912
    %46 = vst.msk [vmem:[#allocation0] sm:$0x1] %vm45, %v44
    %s47 = scalar_lea.vmem %s0, 8
    %v48 = vld [vmem:[%s47] sm:$0x1]
    %49 = vrot.lane.b32.xlu0 %v48, 64
    %v50 = vpop.permute.xlu0 %49
    %vm51 = vcmask 589312
    %52 = vst.msk [vmem:[#allocation0] sm:$0x1] %vm51, %v50
    %s53 = scalar_lea.vmem %s0, 7
    %v54 = vld [vmem:[%s53] sm:$0x1]
    %55 = vrot.lane.b32.xlu0 %v54, 56
    %v56 = vpop.permute.xlu0 %55
    %vm57 = vcmask 523712
    %58 = vst.msk [vmem:[#allocation0] sm:$0x1] %vm57, %v56
    %s59 = scalar_lea.vmem %s0, 6
    %v60 = vld [vmem:[%s59] sm:$0x1]
    %61 = vrot.lane.b32.xlu0 %v60, 48
    %v62 = vpop.permute.xlu0 %61
    %vm63 = vcmask 458112
    %64 = vst.msk [vmem:[#allocation0] sm:$0x1] %vm63, %v62
    %s65 = scalar_lea.vmem %s0, 5
    %v66 = vld [vmem:[%s65] sm:$0x1]
    %67 = vrot.lane.b32.xlu0 %v66, 40
    %v68 = vpop.permute.xlu0 %67
    %vm69 = vcmask 392512
    %70 = vst.msk [vmem:[#allocation0] sm:$0x1] %vm69, %v68
    %s71 = scalar_lea.vmem %s0, 4
    %v72 = vld [vmem:[%s71] sm:$0x1]
    %73 = vrot.lane.b32.xlu0 %v72, 32
    %v74 = vpop.permute.xlu0 %73
    %vm75 = vcmask 326912
    %76 = vst.msk [vmem:[#allocation0] sm:$0x1] %vm75, %v74
    %s77 = scalar_lea.vmem %s0, 3
    %v78 = vld [vmem:[%s77] sm:$0x1]
    %79 = vrot.lane.b32.xlu0 %v78, 24
    %v80 = vpop.permute.xlu0 %79
    %vm81 = vcmask 261312
    %82 = vst.msk [vmem:[#allocation0] sm:$0x1] %vm81, %v80
    %s83 = scalar_lea.vmem %s0, 2
    %v84 = vld [vmem:[%s83] sm:$0x1]
    %85 = vrot.lane.b32.xlu0 %v84, 16
    %v86 = vpop.permute.xlu0 %85
    %vm87 = vcmask 195712
    %88 = vst.msk [vmem:[#allocation0] sm:$0x1] %vm87, %v86
    %s89 = scalar_lea.vmem %s0, 1
    %v90 = vld [vmem:[%s89] sm:$0x1]
    %91 = vrot.lane.b32.xlu0 %v90, 8
    %v92 = vpop.permute.xlu0 %91
    %vm93 = vcmask 130112
    %94 = vst.msk [vmem:[#allocation0] sm:$0x1] %vm93, %v92
    %s96 = sshllo.u32 0, 1
    %v98 = vld [vmem:[#allocation0] sm:%s96]
    %s99 = sshllo.u32 0, 1
    %100 = vst [vmem:[%s1] sm:%s99] %v98

// kernel: basic_block_forward.5
$region0: #{basic_block_forward.5}
  #allocation0 [shape = 'u32[]', space=smem, size = 0x4, offset = 0x4, fixed_abs, tag = 'smem constant byte address 0x4 - core index']
  #allocation1 [shape = 'u32[144,128]{1,0:T(1,128)}', space=vmem, size = 0x12000, scoped, tag = 'internal scratch']
  %s0 = inlined_call_operand.vmem [shape: f32[2,16,128], index: 0, kind: input, shape index: {}]
  %s1 = inlined_call_operand.vmem [shape: f32[1,128], index: 1, kind: input, shape index: {}]
  %s2 = inlined_call_operand.vmem [shape: f32[1,128], index: 2, kind: input, shape index: {}]
  %s3 = inlined_call_operand.vmem [shape: f32[2,16,128], index: 3, kind: output, shape index: {}]
  %s4 = sld [smem:[#allocation0]]
  $region45: #{basic_block_forward.5} parent=0
    _
  %s6 = ssub.s32 1, %s4
  %s7 = scalar_select 0, %s6, %s4
  loop: start=0, step=1, limit=6
  $region2: #{basic_block_forward.5} parent=0 // loop_pre_header
    _
  $region3: #{basic_block_forward.5} parent=0 // loop_header
    %s9 = sphi 0, %s13
    %p10 = scmp.ge.s32.totalorder %s9, 6
    %s16 = sphi 0, %s28
    %s17 = sphi 0, %s24
    %s18 = sphi 0, %s16
    %s19 = sphi 0, %s17
    %s20 = sphi 0, %s18
    %s21 = sphi 0, %s19
    %s33 = sphi 0, %s35
    %s36 = sphi 0, %s33
    %s37 = sphi 0, %s36
    %s53 = sphi 0, %s37
    %s57 = sphi 0, %s57
    %s59 = sphi 0, %s57
    %s60 = sphi 0, %s59
    %s74 = sphi 0, %s60
    %s78 = sphi 0, %s78
    %s80 = sphi 0, %s78
    %s81 = sphi 0, %s80
    %s95 = sphi 0, %s81
    %s103 = sphi 0, %s105
    %s106 = sphi 0, %s103
    %s107 = sphi 0, %s106
    %s123 = sphi 0, %s107
  $region4: #{basic_block_forward.5} parent=0 // loop_header_branch
    %12 = sbr.rel (%p10) target = $region8
  $region5: #{basic_block_forward.5} parent=0 // loop_body
    %s14 = ssub.s32 %s9, 1
    %s15 = ssub.s32 %s9, 2
    %s22 = sadd.s32 1, %s17
    %p23 = scmp.ge.s32.totalorder %s22, 2
    %s24 = scalar_select %p23, 0, %s22
    %s25 = sadd.s32 1, %s16
    %s26 = scalar_select %p23, %s25, %s16
    %p27 = scmp.ge.s32.totalorder %s26, 2
    %s28 = scalar_select %p27, 0, %s26
    %s29 = ssub.s32 %s16, %s28
    %s30 = ssub.s32 %s17, %s24
    %s31 = sor.u32 %s29, %s30
    %p32 = scmp.eq.s32.totalorder %s31, 0
    %s34 = sadd.s32 %s33, 1
    %s35 = scalar_select %p32, %s33, %s34
    %p38 = pneg %p32
    %p39 = scmp.eq.s32.totalorder %s9, 3
    %p40 = por %p38, %p39
    %p41 = scmp.ne.s32.totalorder %s33, %s36
    %p42 = scmp.eq.s32.totalorder %s9, 0
    %p43 = por %p41, %p42
    %p44 = scmp.ne.s32.totalorder %s33, %s36
    %p45 = scmp.eq.s32.totalorder %s14, 3
    %p46 = por %p44, %p45
    %p47 = scmp.ne.s32.totalorder %s36, %s37
    %p48 = scmp.eq.s32.totalorder %s14, 0
    %p49 = por %p47, %p48
    %p50 = scmp.ne.s32.totalorder %s36, %s37
    %p51 = scmp.eq.s32.totalorder %s15, 3
    %p52 = por %p50, %p51
    %p54 = scmp.ne.s32.totalorder %s37, %s53
    %p55 = scmp.eq.s32.totalorder %s15, 0
    %p56 = por %p54, %p55
    %s58 = sadd.s32 %s57, 1
    %p61 = scmp.eq.s32.totalorder %s9, 3
    %p62 = scmp.ne.s32.totalorder %s57, %s59
    %p63 = scmp.eq.s32.totalorder %s9, 0
    %p64 = por %p62, %p63
    %p65 = scmp.ne.s32.totalorder %s57, %s59
    %p66 = scmp.eq.s32.totalorder %s14, 3
    %p67 = por %p65, %p66
    %p68 = scmp.ne.s32.totalorder %s59, %s60
    %p69 = scmp.eq.s32.totalorder %s14, 0
    %p70 = por %p68, %p69
    %p71 = scmp.ne.s32.totalorder %s59, %s60
    %p72 = scmp.eq.s32.totalorder %s15, 3
    %p73 = por %p71, %p72
    %p75 = scmp.ne.s32.totalorder %s60, %s74
    %p76 = scmp.eq.s32.totalorder %s15, 0
    %p77 = por %p75, %p76
    %s79 = sadd.s32 %s78, 1
    %p82 = scmp.eq.s32.totalorder %s9, 3
    %p83 = scmp.ne.s32.totalorder %s78, %s80
    %p84 = scmp.eq.s32.totalorder %s9, 0
    %p85 = por %p83, %p84
    %p86 = scmp.ne.s32.totalorder %s78, %s80
    %p87 = scmp.eq.s32.totalorder %s14, 3
    %p88 = por %p86, %p87
    %p89 = scmp.ne.s32.totalorder %s80, %s81
    %p90 = scmp.eq.s32.totalorder %s14, 0
    %p91 = por %p89, %p90
    %p92 = scmp.ne.s32.totalorder %s80, %s81
    %p93 = scmp.eq.s32.totalorder %s15, 3
    %p94 = por %p92, %p93
    %p96 = scmp.ne.s32.totalorder %s81, %s95
    %p97 = scmp.eq.s32.totalorder %s15, 0
    %p98 = por %p96, %p97
    %s99 = ssub.s32 %s16, %s28
    %s100 = ssub.s32 %s17, %s24
    %s101 = sor.u32 %s99, %s100
    %p102 = scmp.eq.s32.totalorder %s101, 0
    %s104 = sadd.s32 %s103, 1
    %s105 = scalar_select %p102, %s103, %s104
    %p108 = pneg %p102
    %p109 = scmp.eq.s32.totalorder %s9, 3
    %p110 = por %p108, %p109
    %p111 = scmp.ne.s32.totalorder %s103, %s106
    %p112 = scmp.eq.s32.totalorder %s9, 0
    %p113 = por %p111, %p112
    %p114 = scmp.ne.s32.totalorder %s103, %s106
    %p115 = scmp.eq.s32.totalorder %s14, 3
    %p116 = por %p114, %p115
    %p117 = scmp.ne.s32.totalorder %s106, %s107
    %p118 = scmp.eq.s32.totalorder %s14, 0
    %p119 = por %p117, %p118
    %p120 = scmp.ne.s32.totalorder %s106, %s107
    %p121 = scmp.eq.s32.totalorder %s15, 3
    %p122 = por %p120, %p121
    %p124 = scmp.ne.s32.totalorder %s107, %s123
    %p125 = scmp.eq.s32.totalorder %s15, 0
    %p126 = por %p124, %p125
    %p127 = scmp.le.s32.totalorder 1, %s9
    %p128 = scmp.lt.s32.totalorder %s9, 5
    %p129 = pnand %p127, %p128
    %p130 = pneg %p129
    // Predicated region
    $region9: #{basic_block_forward.5} parent=5 // pred_check
      _
    $region10: #{basic_block_forward.5} parent=5 // pred_check_branch
      %132 = sbr.rel (%p129) target = $region12
    $region11: #{basic_block_forward.5} parent=5 // pred_region
      %s133 = ssub.s32 %s9, 1
      // Predicated region
      $region13: #{basic_block_forward.5} parent=11 // pred_check
        %p134 = pneg %p70
      $region14: #{basic_block_forward.5} parent=11 // pred_check_branch
        %136 = sbr.rel (%p134) target = $region16
      $region15: #{basic_block_forward.5} parent=11 // pred_region
        _
      $region16: #{basic_block_forward.5} parent=11 // pred_fallthru
        _
      // Predicated region
      $region17: #{basic_block_forward.5} parent=11 // pred_check
        %p137 = pneg %p91
      $region18: #{basic_block_forward.5} parent=11 // pred_check_branch
        %139 = sbr.rel (%p137) target = $region20
      $region19: #{basic_block_forward.5} parent=11 // pred_region
        _
      $region20: #{basic_block_forward.5} parent=11 // pred_fallthru
        _
    $region12: #{basic_block_forward.5} parent=5 // pred_fallthru
      _
    %p140 = scmp.lt.s32.totalorder %s9, 4
    // Predicated region
    $region21: #{basic_block_forward.5} parent=5 // pred_check
      %p141 = pneg %p140
    $region22: #{basic_block_forward.5} parent=5 // pred_check_branch
      %143 = sbr.rel (%p141) target = $region24
    $region23: #{basic_block_forward.5} parent=5 // pred_region
      // Predicated region
      $region25: #{basic_block_forward.5} parent=23 // pred_check
        %p144 = pneg %p43
      $region26: #{basic_block_forward.5} parent=23 // pred_check_branch
        %146 = sbr.rel (%p144) target = $region28
      $region27: #{basic_block_forward.5} parent=23 // pred_region
        %p147 = scmp.lt.s32.totalorder %s16, 1
        %s148 = scalar_select %p147, %s16, 1
        %p149 = scmp.lt.s32.totalorder %s17, 1
        %s150 = scalar_select %p149, %s17, 1
        %s151 = smul.addr %s148, 2
        %s152 = sadd.s32 %s150, %s151
        %s153 = smul.addr %s152, 8
        %s154 = scalar_lea.vmem %s0, %s153
      $region28: #{basic_block_forward.5} parent=23 // pred_fallthru
        _
    $region24: #{basic_block_forward.5} parent=5 // pred_fallthru
      _
    %p155 = scmp.le.s32.totalorder 1, %s9
    %p156 = scmp.lt.s32.totalorder %s9, 5
    %p157 = pnand %p155, %p156
    %p158 = pneg %p157
    // Predicated region
    $region29: #{basic_block_forward.5} parent=5 // pred_check
      _
    $region30: #{basic_block_forward.5} parent=5 // pred_check_branch
      %160 = sbr.rel (%p157) target = $region32
    $region31: #{basic_block_forward.5} parent=5 // pred_region
      %s161 = ssub.s32 %s9, 1
      %p162 = scmp.lt.s32.totalorder %s18, 1
      %s163 = scalar_select %p162, %s18, 1
      %p164 = scmp.lt.s32.totalorder %s19, 1
      %s165 = scalar_select %p164, %s19, 1
      %s166 = smul.addr %s163, 2
      %s167 = sadd.s32 %s165, %s166
      %s168 = smul.addr %s167, 8
      %s169 = scalar_lea.vmem %s0, %s168
      %p170 = pneg %p49
      %p171 = pneg %p46
      %p172 = pneg %p70
      %p173 = pneg %p67
      %p174 = pneg %p91
      %p175 = pneg %p88
      %p176 = pneg %p119
      %p177 = pneg %p116
      %p178 = scmp.lt.s32.totalorder %s18, 1
      %s179 = scalar_select %p178, %s18, 1
      %p180 = scmp.lt.s32.totalorder %s19, 1
      %s181 = scalar_select %p180, %s19, 1
      %s182 = smul.addr %s179, 2
      %s183 = sadd.s32 %s181, %s182
      %s184 = smul.addr %s183, 8
      %s185 = scalar_lea.vmem %s3, %s184
      %p186 = scmp.lt.s32.totalorder %s18, 1
      %s187 = scalar_select %p186, %s18, 1
      %p188 = scmp.lt.s32.totalorder %s19, 1
      %s189 = scalar_select %p188, %s19, 1
      %s190 = smul.addr %s187, 2
      %s191 = sadd.s32 %s189, %s190
      %s192 = smul.addr %s191, 8
      %s193 = scalar_lea.vmem %s0, %s192
      %p194 = scmp.lt.s32.totalorder %s18, 1
      %s195 = scalar_select %p194, %s18, 1
      %p196 = scmp.lt.s32.totalorder %s19, 1
      %s197 = scalar_select %p196, %s19, 1
      %s198 = smul.addr %s195, 2
      %s199 = sadd.s32 %s197, %s198
      %s200 = smul.addr %s199, 8
      %s201 = scalar_lea.vmem %s3, %s200
      %v202 = vld [vmem:[%s193] sm:$0xff]
      %v203 = vld [vmem:[%s1] sm:$0x1]
      %v205 = vlaneseq
      %v206 = vshrl.u32 %v205, 7
      %v207 = vsub.s32 0, %v206
      %v208 = vrot.slane %v203, %v207
      %v210 = vmul.f32 %v202, %v208
      %v211 = vld [vmem:[%s2] sm:$0x1]
      %v213 = vlaneseq
      %v214 = vshrl.u32 %v213, 7
      %v215 = vsub.s32 0, %v214
      %v216 = vrot.slane %v211, %v215
      %v218 = vadd.f32 %v210, %v216
      %v219 = vmax.f32 %v218, 0.0
      %220 = vst [vmem:[%s201] sm:$0xff] %v219
      %p221 = scmp.lt.s32.totalorder %s18, 1
      %s222 = scalar_select %p221, %s18, 1
      %p223 = scmp.lt.s32.totalorder %s19, 1
      %s224 = scalar_select %p223, %s19, 1
      %s225 = smul.addr %s222, 2
      %s226 = sadd.s32 %s224, %s225
      %s227 = smul.addr %s226, 8
      %s228 = scalar_lea.vmem %s3, %s227
      // Predicated region
      $region33: #{basic_block_forward.5} parent=31 // pred_check
        %p229 = pneg %p116
      $region34: #{basic_block_forward.5} parent=31 // pred_check_branch
        %231 = sbr.rel (%p229) target = $region36
      $region35: #{basic_block_forward.5} parent=31 // pred_region
        _
      $region36: #{basic_block_forward.5} parent=31 // pred_fallthru
        _
    $region32: #{basic_block_forward.5} parent=5 // pred_fallthru
      _
    %p232 = scmp.le.s32.totalorder 2, %s9
    // Predicated region
    $region37: #{basic_block_forward.5} parent=5 // pred_check
      %p233 = pneg %p232
    $region38: #{basic_block_forward.5} parent=5 // pred_check_branch
      %235 = sbr.rel (%p233) target = $region40
    $region39: #{basic_block_forward.5} parent=5 // pred_region
      %s236 = ssub.s32 %s9, 2
      // Predicated region
      $region41: #{basic_block_forward.5} parent=39 // pred_check
        %p237 = pneg %p122
      $region42: #{basic_block_forward.5} parent=39 // pred_check_branch
        %239 = sbr.rel (%p237) target = $region44
      $region43: #{basic_block_forward.5} parent=39 // pred_region
        %p240 = scmp.lt.s32.totalorder %s20, 1
        %s241 = scalar_select %p240, %s20, 1
        %p242 = scmp.lt.s32.totalorder %s21, 1
        %s243 = scalar_select %p242, %s21, 1
        %s244 = smul.addr %s241, 2
        %s245 = sadd.s32 %s243, %s244
        %s246 = smul.addr %s245, 8
        %s247 = scalar_lea.vmem %s3, %s246
      $region44: #{basic_block_forward.5} parent=39 // pred_fallthru
        _
    $region40: #{basic_block_forward.5} parent=5 // pred_fallthru
      _
  $region6: #{basic_block_forward.5} parent=0 // loop_footer
    %s13 = sadd.s32 1, %s9
  $region7: #{basic_block_forward.5} parent=0 // loop_footer_branch
    %8 = sbr.rel target = $region3
  $region8: #{basic_block_forward.5} parent=0 // loop_exit
    _

// kernel: basic_block_forward.4
$region0: #{basic_block_forward.4}
  #allocation0 [shape = 'u32[]', space=smem, size = 0x4, offset = 0x4, fixed_abs, tag = 'smem constant byte address 0x4 - core index']
  #allocation1 [shape = 'u32[144,128]{1,0:T(1,128)}', space=vmem, size = 0x12000, scoped, tag = 'internal scratch']
  %s0 = inlined_call_operand.vmem [shape: bf16[2,2,10,18,8], index: 0, kind: input, shape index: {}]
  %s1 = inlined_call_operand.vmem [shape: bf16[72,8], index: 1, kind: input, shape index: {}]
  %s2 = inlined_call_operand.vmem [shape: f32[2,16,16,8], index: 2, kind: output, shape index: {0}]
  %s3 = inlined_call_operand.vmem [shape: f32[2,2,2,8], index: 3, kind: output, shape index: {1}]
  %4 = xla_tuple %s2, %s3
  %s5 = sld [smem:[#allocation0]]
  $region49: #{basic_block_forward.4} parent=0
    _
  %s7 = ssub.s32 1, %s5
  %s8 = scalar_select 0, %s7, %s5
  loop: start=0, step=1, limit=6
  $region2: #{basic_block_forward.4} parent=0 // loop_pre_header
    _
  $region3: #{basic_block_forward.4} parent=0 // loop_header
    %s10 = sphi 0, %s14
    %p11 = scmp.ge.s32.totalorder %s10, 6
    %s17 = sphi 0, %s29
    %s18 = sphi 0, %s25
    %s19 = sphi 0, %s17
    %s20 = sphi 0, %s18
    %s21 = sphi 0, %s19
    %s22 = sphi 0, %s20
    %s34 = sphi 0, %s36
    %s37 = sphi 0, %s34
    %s38 = sphi 0, %s37
    %s54 = sphi 0, %s38
    %s58 = sphi 0, %s58
    %s60 = sphi 0, %s58
    %s61 = sphi 0, %s60
    %s75 = sphi 0, %s61
    %s83 = sphi 0, %s85
    %s86 = sphi 0, %s83
    %s87 = sphi 0, %s86
    %s103 = sphi 0, %s87
    %s111 = sphi 0, %s113
    %s114 = sphi 0, %s111
    %s115 = sphi 0, %s114
    %s131 = sphi 0, %s115
  $region4: #{basic_block_forward.4} parent=0 // loop_header_branch
    %13 = sbr.rel (%p11) target = $region8
  $region5: #{basic_block_forward.4} parent=0 // loop_body
    %s15 = ssub.s32 %s10, 1
    %s16 = ssub.s32 %s10, 2
    %s23 = sadd.s32 1, %s18
    %p24 = scmp.ge.s32.totalorder %s23, 2
    %s25 = scalar_select %p24, 0, %s23
    %s26 = sadd.s32 1, %s17
    %s27 = scalar_select %p24, %s26, %s17
    %p28 = scmp.ge.s32.totalorder %s27, 2
    %s29 = scalar_select %p28, 0, %s27
    %s30 = ssub.s32 %s17, %s29
    %s31 = ssub.s32 %s18, %s25
    %s32 = sor.u32 %s30, %s31
    %p33 = scmp.eq.s32.totalorder %s32, 0
    %s35 = sadd.s32 %s34, 1
    %s36 = scalar_select %p33, %s34, %s35
    %p39 = pneg %p33
    %p40 = scmp.eq.s32.totalorder %s10, 3
    %p41 = por %p39, %p40
    %p42 = scmp.ne.s32.totalorder %s34, %s37
    %p43 = scmp.eq.s32.totalorder %s10, 0
    %p44 = por %p42, %p43
    %p45 = scmp.ne.s32.totalorder %s34, %s37
    %p46 = scmp.eq.s32.totalorder %s15, 3
    %p47 = por %p45, %p46
    %p48 = scmp.ne.s32.totalorder %s37, %s38
    %p49 = scmp.eq.s32.totalorder %s15, 0
    %p50 = por %p48, %p49
    %p51 = scmp.ne.s32.totalorder %s37, %s38
    %p52 = scmp.eq.s32.totalorder %s16, 3
    %p53 = por %p51, %p52
    %p55 = scmp.ne.s32.totalorder %s38, %s54
    %p56 = scmp.eq.s32.totalorder %s16, 0
    %p57 = por %p55, %p56
    %s59 = sadd.s32 %s58, 1
    %p62 = scmp.eq.s32.totalorder %s10, 3
    %p63 = scmp.ne.s32.totalorder %s58, %s60
    %p64 = scmp.eq.s32.totalorder %s10, 0
    %p65 = por %p63, %p64
    %p66 = scmp.ne.s32.totalorder %s58, %s60
    %p67 = scmp.eq.s32.totalorder %s15, 3
    %p68 = por %p66, %p67
    %p69 = scmp.ne.s32.totalorder %s60, %s61
    %p70 = scmp.eq.s32.totalorder %s15, 0
    %p71 = por %p69, %p70
    %p72 = scmp.ne.s32.totalorder %s60, %s61
    %p73 = scmp.eq.s32.totalorder %s16, 3
    %p74 = por %p72, %p73
    %p76 = scmp.ne.s32.totalorder %s61, %s75
    %p77 = scmp.eq.s32.totalorder %s16, 0
    %p78 = por %p76, %p77
    %s79 = ssub.s32 %s17, %s29
    %s80 = ssub.s32 %s18, %s25
    %s81 = sor.u32 %s79, %s80
    %p82 = scmp.eq.s32.totalorder %s81, 0
    %s84 = sadd.s32 %s83, 1
    %s85 = scalar_select %p82, %s83, %s84
    %p88 = pneg %p82
    %p89 = scmp.eq.s32.totalorder %s10, 3
    %p90 = por %p88, %p89
    %p91 = scmp.ne.s32.totalorder %s83, %s86
    %p92 = scmp.eq.s32.totalorder %s10, 0
    %p93 = por %p91, %p92
    %p94 = scmp.ne.s32.totalorder %s83, %s86
    %p95 = scmp.eq.s32.totalorder %s15, 3
    %p96 = por %p94, %p95
    %p97 = scmp.ne.s32.totalorder %s86, %s87
    %p98 = scmp.eq.s32.totalorder %s15, 0
    %p99 = por %p97, %p98
    %p100 = scmp.ne.s32.totalorder %s86, %s87
    %p101 = scmp.eq.s32.totalorder %s16, 3
    %p102 = por %p100, %p101
    %p104 = scmp.ne.s32.totalorder %s87, %s103
    %p105 = scmp.eq.s32.totalorder %s16, 0
    %p106 = por %p104, %p105
    %s107 = ssub.s32 %s17, %s29
    %s108 = ssub.s32 %s18, %s25
    %s109 = sor.u32 %s107, %s108
    %p110 = scmp.eq.s32.totalorder %s109, 0
    %s112 = sadd.s32 %s111, 1
    %s113 = scalar_select %p110, %s111, %s112
    %p116 = pneg %p110
    %p117 = scmp.eq.s32.totalorder %s10, 3
    %p118 = por %p116, %p117
    %p119 = scmp.ne.s32.totalorder %s111, %s114
    %p120 = scmp.eq.s32.totalorder %s10, 0
    %p121 = por %p119, %p120
    %p122 = scmp.ne.s32.totalorder %s111, %s114
    %p123 = scmp.eq.s32.totalorder %s15, 3
    %p124 = por %p122, %p123
    %p125 = scmp.ne.s32.totalorder %s114, %s115
    %p126 = scmp.eq.s32.totalorder %s15, 0
    %p127 = por %p125, %p126
    %p128 = scmp.ne.s32.totalorder %s114, %s115
    %p129 = scmp.eq.s32.totalorder %s16, 3
    %p130 = por %p128, %p129
    %p132 = scmp.ne.s32.totalorder %s115, %s131
    %p133 = scmp.eq.s32.totalorder %s16, 0
    %p134 = por %p132, %p133
    %p135 = scmp.le.s32.totalorder 1, %s10
    %p136 = scmp.lt.s32.totalorder %s10, 5
    %p137 = pnand %p135, %p136
    %p138 = pneg %p137
    // Predicated region
    $region9: #{basic_block_forward.4} parent=5 // pred_check
      _
    $region10: #{basic_block_forward.4} parent=5 // pred_check_branch
      %140 = sbr.rel (%p137) target = $region12
    $region11: #{basic_block_forward.4} parent=5 // pred_region
      %s141 = ssub.s32 %s10, 1
      // Predicated region
      $region13: #{basic_block_forward.4} parent=11 // pred_check
        %p142 = pneg %p71
      $region14: #{basic_block_forward.4} parent=11 // pred_check_branch
        %144 = sbr.rel (%p142) target = $region16
      $region15: #{basic_block_forward.4} parent=11 // pred_region
        _
      $region16: #{basic_block_forward.4} parent=11 // pred_fallthru
        _
    $region12: #{basic_block_forward.4} parent=5 // pred_fallthru
      _
    %p145 = scmp.lt.s32.totalorder %s10, 4
    // Predicated region
    $region17: #{basic_block_forward.4} parent=5 // pred_check
      %p146 = pneg %p145
    $region18: #{basic_block_forward.4} parent=5 // pred_check_branch
      %148 = sbr.rel (%p146) target = $region20
    $region19: #{basic_block_forward.4} parent=5 // pred_region
      // Predicated region
      $region21: #{basic_block_forward.4} parent=19 // pred_check
        %p149 = pneg %p44
      $region22: #{basic_block_forward.4} parent=19 // pred_check_branch
        %151 = sbr.rel (%p149) target = $region24
      $region23: #{basic_block_forward.4} parent=19 // pred_region
        %p152 = scmp.lt.s32.totalorder %s17, 1
        %s153 = scalar_select %p152, %s17, 1
        %p154 = scmp.lt.s32.totalorder %s18, 1
        %s155 = scalar_select %p154, %s18, 1
        %s156 = smul.addr %s155, 30
        %s157 = smul.addr %s153, 60
        %s158 = sadd.s32 %s156, %s157
        %s159 = smul.addr %s158, 4
        %s160 = scalar_lea.vmem %s0, %s159
      $region24: #{basic_block_forward.4} parent=19 // pred_fallthru
        _
    $region20: #{basic_block_forward.4} parent=5 // pred_fallthru
      _
    %p161 = scmp.le.s32.totalorder 1, %s10
    %p162 = scmp.lt.s32.totalorder %s10, 5
    %p163 = pnand %p161, %p162
    %p164 = pneg %p163
    // Predicated region
    $region25: #{basic_block_forward.4} parent=5 // pred_check
      _
    $region26: #{basic_block_forward.4} parent=5 // pred_check_branch
      %166 = sbr.rel (%p163) target = $region28
    $region27: #{basic_block_forward.4} parent=5 // pred_region
      %s167 = ssub.s32 %s10, 1
      %p168 = scmp.lt.s32.totalorder %s19, 1
      %s169 = scalar_select %p168, %s19, 1
      %p170 = scmp.lt.s32.totalorder %s20, 1
      %s171 = scalar_select %p170, %s20, 1
      %s172 = smul.addr %s171, 30
      %s173 = smul.addr %s169, 60
      %s174 = sadd.s32 %s172, %s173
      %s175 = smul.addr %s174, 4
      %s176 = scalar_lea.vmem %s0, %s175
      %p177 = pneg %p50
      %p178 = pneg %p47
      %p179 = pneg %p71
      %p180 = pneg %p68
      %p181 = pneg %p99
      %p182 = pneg %p96
      %s183 = smul.u32 8, %s20
      %p184 = scmp.lt.s32.totalorder %s19, 1
      %s185 = scalar_select %p184, %s19, 1
      %p186 = scmp.lt.s32.totalorder %s183, 15
      %s187 = scalar_select %p186, %s183, 15
      %s188 = smul.addr %s187, 2
      %s189 = smul.addr %s185, 32
      %s190 = sadd.s32 %s188, %s189
      %s191 = smul.addr %s190, 8
      %s192 = scalar_lea.vmem %s2, %s191
      %p193 = pneg %p127
      %p194 = pneg %p124
      %p195 = scmp.lt.s32.totalorder %s19, 1
      %s196 = scalar_select %p195, %s19, 1
      %p197 = scmp.lt.s32.totalorder %s20, 1
      %s198 = scalar_select %p197, %s20, 1
      %s199 = smul.addr %s196, 2
      %s200 = sadd.s32 %s198, %s199
      %s201 = smul.addr %s200, 2
      %s202 = scalar_lea.vmem %s3, %s201
      %p203 = scmp.lt.s32.totalorder %s19, 1
      %s204 = scalar_select %p203, %s19, 1
      %p205 = scmp.lt.s32.totalorder %s20, 1
      %s206 = scalar_select %p205, %s20, 1
      %s207 = smul.addr %s206, 30
      %s208 = smul.addr %s204, 60
      %s209 = sadd.s32 %s207, %s208
      %s210 = smul.addr %s209, 4
      %s211 = scalar_lea.vmem %s0, %s210
      %s212 = smul.u32 8, %s20
      %p213 = scmp.lt.s32.totalorder %s19, 1
      %s214 = scalar_select %p213, %s19, 1
      %p215 = scmp.lt.s32.totalorder %s212, 15
      %s216 = scalar_select %p215, %s212, 15
      %s217 = smul.addr %s216, 2
      %s218 = smul.addr %s214, 32
      %s219 = sadd.s32 %s217, %s218
      %s220 = smul.addr %s219, 8
      %s221 = scalar_lea.vmem %s2, %s220
      %s222 = smul.u32 8, %s20
      %p223 = scmp.lt.s32.totalorder %s19, 1
      %s224 = scalar_select %p223, %s19, 1
      %p225 = scmp.lt.s32.totalorder %s20, 1
      %s226 = scalar_select %p225, %s20, 1
      %s227 = smul.addr %s224, 2
      %s228 = sadd.s32 %s226, %s227
      %s229 = smul.addr %s228, 2
      %s230 = scalar_lea.vmem %s3, %s229
      %v232 = vld [vmem:[%s211] sm:$0xf]
      %v233 = vld [vmem:[%s211 + $0x4] sm:$0xf]
      %v234 = vld [vmem:[%s211 + $0x8] sm:$0x1]
      %v235 = vld [vmem:[%s211 + $0xc] sm:$0xf]
      %v236 = vld [vmem:[%s211 + $0x10] sm:$0xf]
      %v237 = vld [vmem:[%s211 + $0x14] sm:$0x1]
      %v238 = vld [vmem:[%s211 + $0x18] sm:$0xf]
      %v239 = vld [vmem:[%s211 + $0x1c] sm:$0xf]
      %v240 = vld [vmem:[%s211 + $0x20] sm:$0x1]
      %v241 = vld [vmem:[%s211 + $0x24] sm:$0xf]
      %v242 = vld [vmem:[%s211 + $0x28] sm:$0xf]
      %v243 = vld [vmem:[%s211 + $0x2c] sm:$0x1]
      %v244 = vld [vmem:[%s211 + $0x30] sm:$0xf]
      %v245 = vld [vmem:[%s211 + $0x34] sm:$0xf]
      %v246 = vld [vmem:[%s211 + $0x38] sm:$0x1]
      %v247 = vld [vmem:[%s211 + $0x3c] sm:$0xf]
      %v248 = vld [vmem:[%s211 + $0x40] sm:$0xf]
      %v249 = vld [vmem:[%s211 + $0x44] sm:$0x1]
      %v250 = vld [vmem:[%s211 + $0x48] sm:$0xf]
      %v251 = vld [vmem:[%s211 + $0x4c] sm:$0xf]
      %v252 = vld [vmem:[%s211 + $0x50] sm:$0x1]
      %v253 = vld [vmem:[%s211 + $0x54] sm:$0xf]
      %v254 = vld [vmem:[%s211 + $0x58] sm:$0xf]
      %v255 = vld [vmem:[%s211 + $0x5c] sm:$0x1]
      %v256 = vld [vmem:[%s211 + $0x60] sm:$0xf]
      %v257 = vld [vmem:[%s211 + $0x64] sm:$0xf]
      %v258 = vld [vmem:[%s211 + $0x68] sm:$0x1]
      %v259 = vld [vmem:[%s211 + $0x6c] sm:$0xf]
      %v260 = vld [vmem:[%s211 + $0x70] sm:$0xf]
      %v261 = vld [vmem:[%s211 + $0x74] sm:$0x1]
      %v262 = vunpack.c.l.bf16 %v232
      %v263 = vunpack.c.l.bf16 %v233
      %v264 = vunpack.c.l.bf16 %v234
      %v265 = vunpack.c.l.bf16 %v235
      %v266 = vunpack.c.l.bf16 %v236
      %v267 = vunpack.c.l.bf16 %v237
      %v268 = vunpack.c.l.bf16 %v238
      %v269 = vunpack.c.l.bf16 %v239
      %v270 = vunpack.c.l.bf16 %v240
      %v271 = vunpack.c.l.bf16 %v241
      %v272 = vunpack.c.l.bf16 %v242
      %v273 = vunpack.c.l.bf16 %v243
      %v274 = vunpack.c.l.bf16 %v244
      %v275 = vunpack.c.l.bf16 %v245
      %v276 = vunpack.c.l.bf16 %v246
      %v277 = vunpack.c.l.bf16 %v247
      %v278 = vunpack.c.l.bf16 %v248
      %v279 = vunpack.c.l.bf16 %v249
      %v280 = vunpack.c.l.bf16 %v250
      %v281 = vunpack.c.l.bf16 %v251
      %v282 = vunpack.c.l.bf16 %v252
      %v283 = vunpack.c.l.bf16 %v253
      %v284 = vunpack.c.l.bf16 %v254
      %v285 = vunpack.c.l.bf16 %v255
      %v286 = vunpack.c.l.bf16 %v256
      %v287 = vunpack.c.l.bf16 %v257
      %v288 = vunpack.c.l.bf16 %v258
      %v289 = vunpack.c.l.bf16 %v259
      %v290 = vunpack.c.l.bf16 %v260
      %v291 = vunpack.c.l.bf16 %v261
      %vm316 = vcmask 1046528
      %v317 = vrot.slane %v262, 1
      %v318 = vrot.slane %v263, 1
      %v319 = vsel %vm316, %v317, %v318
      %v320 = vrot.slane %v264, 1
      %v321 = vsel %vm316, %v318, %v320
      %v322 = vrot.slane %v265, 1
      %v323 = vrot.slane %v266, 1
      %v324 = vsel %vm316, %v322, %v323
      %v325 = vrot.slane %v267, 1
      %v326 = vsel %vm316, %v323, %v325
      %v327 = vrot.slane %v268, 1
      %v328 = vrot.slane %v269, 1
      %v329 = vsel %vm316, %v327, %v328
      %v330 = vrot.slane %v270, 1
      %v331 = vsel %vm316, %v328, %v330
      %v332 = vrot.slane %v271, 1
      %v333 = vrot.slane %v272, 1
      %v334 = vsel %vm316, %v332, %v333
      %v335 = vrot.slane %v273, 1
      %v336 = vsel %vm316, %v333, %v335
      %v337 = vrot.slane %v274, 1
      %v338 = vrot.slane %v275, 1
      %v339 = vsel %vm316, %v337, %v338
      %v340 = vrot.slane %v276, 1
      %v341 = vsel %vm316, %v338, %v340
      %v342 = vrot.slane %v277, 1
      %v343 = vrot.slane %v278, 1
      %v344 = vsel %vm316, %v342, %v343
      %v345 = vrot.slane %v279, 1
      %v346 = vsel %vm316, %v343, %v345
      %v347 = vrot.slane %v280, 1
      %v348 = vrot.slane %v281, 1
      %v349 = vsel %vm316, %v347, %v348
      %v350 = vrot.slane %v282, 1
      %v351 = vsel %vm316, %v348, %v350
      %v352 = vrot.slane %v283, 1
      %v353 = vrot.slane %v284, 1
      %v354 = vsel %vm316, %v352, %v353
      %v355 = vrot.slane %v285, 1
      %v356 = vsel %vm316, %v353, %v355
      %vm357 = vcmask 1045504
      %v358 = vrot.slane %v262, 2
      %v359 = vrot.slane %v263, 2
      %v360 = vsel %vm357, %v358, %v359
      %v361 = vrot.slane %v264, 2
      %v362 = vsel %vm357, %v359, %v361
      %v363 = vrot.slane %v265, 2
      %v364 = vrot.slane %v266, 2
      %v365 = vsel %vm357, %v363, %v364
      %v366 = vrot.slane %v267, 2
      %v367 = vsel %vm357, %v364, %v366
      %v368 = vrot.slane %v268, 2
      %v369 = vrot.slane %v269, 2
      %v370 = vsel %vm357, %v368, %v369
      %v371 = vrot.slane %v270, 2
      %v372 = vsel %vm357, %v369, %v371
      %v373 = vrot.slane %v271, 2
      %v374 = vrot.slane %v272, 2
      %v375 = vsel %vm357, %v373, %v374
      %v376 = vrot.slane %v273, 2
      %v377 = vsel %vm357, %v374, %v376
      %v378 = vrot.slane %v274, 2
      %v379 = vrot.slane %v275, 2
      %v380 = vsel %vm357, %v378, %v379
      %v381 = vrot.slane %v276, 2
      %v382 = vsel %vm357, %v379, %v381
      %v383 = vrot.slane %v277, 2
      %v384 = vrot.slane %v278, 2
      %v385 = vsel %vm357, %v383, %v384
      %v386 = vrot.slane %v279, 2
      %v387 = vsel %vm357, %v384, %v386
      %v388 = vrot.slane %v280, 2
      %v389 = vrot.slane %v281, 2
      %v390 = vsel %vm357, %v388, %v389
      %v391 = vrot.slane %v282, 2
      %v392 = vsel %vm357, %v389, %v391
      %v393 = vrot.slane %v283, 2
      %v394 = vrot.slane %v284, 2
      %v395 = vsel %vm357, %v393, %v394
      %v396 = vrot.slane %v285, 2
      %v397 = vsel %vm357, %v394, %v396
      %v401 = vrot.slane %v286, 1
      %v402 = vrot.slane %v287, 1
      %v403 = vsel %vm316, %v401, %v402
      %v404 = vrot.slane %v288, 1
      %v405 = vsel %vm316, %v402, %v404
      %v406 = vrot.slane %v286, 2
      %v407 = vrot.slane %v287, 2
      %v408 = vsel %vm357, %v406, %v407
      %v409 = vrot.slane %v288, 2
      %v410 = vsel %vm357, %v407, %v409
      %v414 = vrot.slane %v289, 1
      %v415 = vrot.slane %v290, 1
      %v416 = vsel %vm316, %v414, %v415
      %v417 = vrot.slane %v291, 1
      %v418 = vsel %vm316, %v415, %v417
      %v419 = vrot.slane %v289, 2
      %v420 = vrot.slane %v290, 2
      %v421 = vsel %vm357, %v419, %v420
      %v422 = vrot.slane %v291, 2
      %v423 = vsel %vm357, %v420, %v422
      %424 = vrot.lane.b32.xlu0 %v319, 8
      %v425 = vpop.permute.xlu0 %424
      %426 = vrot.lane.b32.xlu0 %v321, 8
      %v427 = vpop.permute.xlu0 %426
      %428 = vrot.lane.b32.xlu0 %v324, 8
      %v429 = vpop.permute.xlu0 %428
      %430 = vrot.lane.b32.xlu0 %v326, 8
      %v431 = vpop.permute.xlu0 %430
      %432 = vrot.lane.b32.xlu0 %v329, 8
      %v433 = vpop.permute.xlu0 %432
      %434 = vrot.lane.b32.xlu0 %v331, 8
      %v435 = vpop.permute.xlu0 %434
      %436 = vrot.lane.b32.xlu0 %v334, 8
      %v437 = vpop.permute.xlu0 %436
      %438 = vrot.lane.b32.xlu0 %v336, 8
      %v439 = vpop.permute.xlu0 %438
      %440 = vrot.lane.b32.xlu0 %v339, 8
      %v441 = vpop.permute.xlu0 %440
      %442 = vrot.lane.b32.xlu0 %v341, 8
      %v443 = vpop.permute.xlu0 %442
      %444 = vrot.lane.b32.xlu0 %v344, 8
      %v445 = vpop.permute.xlu0 %444
      %446 = vrot.lane.b32.xlu0 %v346, 8
      %v447 = vpop.permute.xlu0 %446
      %448 = vrot.lane.b32.xlu0 %v349, 8
      %v449 = vpop.permute.xlu0 %448
      %450 = vrot.lane.b32.xlu0 %v351, 8
      %v451 = vpop.permute.xlu0 %450
      %452 = vrot.lane.b32.xlu0 %v354, 8
      %v453 = vpop.permute.xlu0 %452
      %454 = vrot.lane.b32.xlu0 %v356, 8
      %v455 = vpop.permute.xlu0 %454
      %472 = vrot.lane.b32.xlu0 %v360, 16
      %v473 = vpop.permute.xlu0 %472
      %474 = vrot.lane.b32.xlu0 %v362, 16
      %v475 = vpop.permute.xlu0 %474
      %476 = vrot.lane.b32.xlu0 %v365, 16
      %v477 = vpop.permute.xlu0 %476
      %478 = vrot.lane.b32.xlu0 %v367, 16
      %v479 = vpop.permute.xlu0 %478
      %480 = vrot.lane.b32.xlu0 %v370, 16
      %v481 = vpop.permute.xlu0 %480
      %482 = vrot.lane.b32.xlu0 %v372, 16
      %v483 = vpop.permute.xlu0 %482
      %484 = vrot.lane.b32.xlu0 %v375, 16
      %v485 = vpop.permute.xlu0 %484
      %486 = vrot.lane.b32.xlu0 %v377, 16
      %v487 = vpop.permute.xlu0 %486
      %488 = vrot.lane.b32.xlu0 %v380, 16
      %v489 = vpop.permute.xlu0 %488
      %490 = vrot.lane.b32.xlu0 %v382, 16
      %v491 = vpop.permute.xlu0 %490
      %492 = vrot.lane.b32.xlu0 %v385, 16
      %v493 = vpop.permute.xlu0 %492
      %494 = vrot.lane.b32.xlu0 %v387, 16
      %v495 = vpop.permute.xlu0 %494
      %496 = vrot.lane.b32.xlu0 %v390, 16
      %v497 = vpop.permute.xlu0 %496
      %498 = vrot.lane.b32.xlu0 %v392, 16
      %v499 = vpop.permute.xlu0 %498
      %500 = vrot.lane.b32.xlu0 %v395, 16
      %v501 = vpop.permute.xlu0 %500
      %502 = vrot.lane.b32.xlu0 %v397, 16
      %v503 = vpop.permute.xlu0 %502
      %520 = vrot.lane.b32.xlu0 %v265, 24
      %v521 = vpop.permute.xlu0 %520
      %522 = vrot.lane.b32.xlu0 %v266, 24
      %v523 = vpop.permute.xlu0 %522
      %524 = vrot.lane.b32.xlu0 %v268, 24
      %v525 = vpop.permute.xlu0 %524
      %526 = vrot.lane.b32.xlu0 %v269, 24
      %v527 = vpop.permute.xlu0 %526
      %528 = vrot.lane.b32.xlu0 %v271, 24
      %v529 = vpop.permute.xlu0 %528
      %530 = vrot.lane.b32.xlu0 %v272, 24
      %v531 = vpop.permute.xlu0 %530
      %532 = vrot.lane.b32.xlu0 %v274, 24
      %v533 = vpop.permute.xlu0 %532
      %534 = vrot.lane.b32.xlu0 %v275, 24
      %v535 = vpop.permute.xlu0 %534
      %536 = vrot.lane.b32.xlu0 %v277, 24
      %v537 = vpop.permute.xlu0 %536
      %538 = vrot.lane.b32.xlu0 %v278, 24
      %v539 = vpop.permute.xlu0 %538
      %540 = vrot.lane.b32.xlu0 %v280, 24
      %v541 = vpop.permute.xlu0 %540
      %542 = vrot.lane.b32.xlu0 %v281, 24
      %v543 = vpop.permute.xlu0 %542
      %544 = vrot.lane.b32.xlu0 %v283, 24
      %v545 = vpop.permute.xlu0 %544
      %546 = vrot.lane.b32.xlu0 %v284, 24
      %v547 = vpop.permute.xlu0 %546
      %548 = vrot.lane.b32.xlu0 %v286, 24
      %v549 = vpop.permute.xlu0 %548
      %550 = vrot.lane.b32.xlu0 %v287, 24
      %v551 = vpop.permute.xlu0 %550
      %568 = vrot.lane.b32.xlu0 %v324, 32
      %v569 = vpop.permute.xlu0 %568
      %570 = vrot.lane.b32.xlu0 %v326, 32
      %v571 = vpop.permute.xlu0 %570
      %572 = vrot.lane.b32.xlu0 %v329, 32
      %v573 = vpop.permute.xlu0 %572
      %574 = vrot.lane.b32.xlu0 %v331, 32
      %v575 = vpop.permute.xlu0 %574
      %576 = vrot.lane.b32.xlu0 %v334, 32
      %v577 = vpop.permute.xlu0 %576
      %578 = vrot.lane.b32.xlu0 %v336, 32
      %v579 = vpop.permute.xlu0 %578
      %580 = vrot.lane.b32.xlu0 %v339, 32
      %v581 = vpop.permute.xlu0 %580
      %582 = vrot.lane.b32.xlu0 %v341, 32
      %v583 = vpop.permute.xlu0 %582
      %584 = vrot.lane.b32.xlu0 %v344, 32
      %v585 = vpop.permute.xlu0 %584
      %586 = vrot.lane.b32.xlu0 %v346, 32
      %v587 = vpop.permute.xlu0 %586
      %588 = vrot.lane.b32.xlu0 %v349, 32
      %v589 = vpop.permute.xlu0 %588
      %590 = vrot.lane.b32.xlu0 %v351, 32
      %v591 = vpop.permute.xlu0 %590
      %592 = vrot.lane.b32.xlu0 %v354, 32
      %v593 = vpop.permute.xlu0 %592
      %594 = vrot.lane.b32.xlu0 %v356, 32
      %v595 = vpop.permute.xlu0 %594
      %596 = vrot.lane.b32.xlu0 %v403, 32
      %v597 = vpop.permute.xlu0 %596
      %598 = vrot.lane.b32.xlu0 %v405, 32
      %v599 = vpop.permute.xlu0 %598
      %616 = vrot.lane.b32.xlu0 %v365, 40
      %v617 = vpop.permute.xlu0 %616
      %618 = vrot.lane.b32.xlu0 %v367, 40
      %v619 = vpop.permute.xlu0 %618
      %620 = vrot.lane.b32.xlu0 %v370, 40
      %v621 = vpop.permute.xlu0 %620
      %622 = vrot.lane.b32.xlu0 %v372, 40
      %v623 = vpop.permute.xlu0 %622
      %624 = vrot.lane.b32.xlu0 %v375, 40
      %v625 = vpop.permute.xlu0 %624
      %626 = vrot.lane.b32.xlu0 %v377, 40
      %v627 = vpop.permute.xlu0 %626
      %628 = vrot.lane.b32.xlu0 %v380, 40
      %v629 = vpop.permute.xlu0 %628
      %630 = vrot.lane.b32.xlu0 %v382, 40
      %v631 = vpop.permute.xlu0 %630
      %632 = vrot.lane.b32.xlu0 %v385, 40
      %v633 = vpop.permute.xlu0 %632
      %634 = vrot.lane.b32.xlu0 %v387, 40
      %v635 = vpop.permute.xlu0 %634
      %636 = vrot.lane.b32.xlu0 %v390, 40
      %v637 = vpop.permute.xlu0 %636
      %638 = vrot.lane.b32.xlu0 %v392, 40
      %v639 = vpop.permute.xlu0 %638
      %640 = vrot.lane.b32.xlu0 %v395, 40
      %v641 = vpop.permute.xlu0 %640
      %642 = vrot.lane.b32.xlu0 %v397, 40
      %v643 = vpop.permute.xlu0 %642
      %644 = vrot.lane.b32.xlu0 %v408, 40
      %v645 = vpop.permute.xlu0 %644
      %646 = vrot.lane.b32.xlu0 %v410, 40
      %v647 = vpop.permute.xlu0 %646
      %664 = vrot.lane.b32.xlu0 %v268, 48
      %v665 = vpop.permute.xlu0 %664
      %666 = vrot.lane.b32.xlu0 %v269, 48
      %v667 = vpop.permute.xlu0 %666
      %668 = vrot.lane.b32.xlu0 %v271, 48
      %v669 = vpop.permute.xlu0 %668
      %670 = vrot.lane.b32.xlu0 %v272, 48
      %v671 = vpop.permute.xlu0 %670
      %672 = vrot.lane.b32.xlu0 %v274, 48
      %v673 = vpop.permute.xlu0 %672
      %674 = vrot.lane.b32.xlu0 %v275, 48
      %v675 = vpop.permute.xlu0 %674
      %676 = vrot.lane.b32.xlu0 %v277, 48
      %v677 = vpop.permute.xlu0 %676
      %678 = vrot.lane.b32.xlu0 %v278, 48
      %v679 = vpop.permute.xlu0 %678
      %680 = vrot.lane.b32.xlu0 %v280, 48
      %v681 = vpop.permute.xlu0 %680
      %682 = vrot.lane.b32.xlu0 %v281, 48
      %v683 = vpop.permute.xlu0 %682
      %684 = vrot.lane.b32.xlu0 %v283, 48
      %v685 = vpop.permute.xlu0 %684
      %686 = vrot.lane.b32.xlu0 %v284, 48
      %v687 = vpop.permute.xlu0 %686
      %688 = vrot.lane.b32.xlu0 %v286, 48
      %v689 = vpop.permute.xlu0 %688
      %690 = vrot.lane.b32.xlu0 %v287, 48
      %v691 = vpop.permute.xlu0 %690
      %692 = vrot.lane.b32.xlu0 %v289, 48
      %v693 = vpop.permute.xlu0 %692
      %694 = vrot.lane.b32.xlu0 %v290, 48
      %v695 = vpop.permute.xlu0 %694
      %712 = vrot.lane.b32.xlu0 %v329, 56
      %v713 = vpop.permute.xlu0 %712
      %714 = vrot.lane.b32.xlu0 %v331, 56
      %v715 = vpop.permute.xlu0 %714
      %716 = vrot.lane.b32.xlu0 %v334, 56
      %v717 = vpop.permute.xlu0 %716
      %718 = vrot.lane.b32.xlu0 %v336, 56
      %v719 = vpop.permute.xlu0 %718
      %720 = vrot.lane.b32.xlu0 %v339, 56
      %v721 = vpop.permute.xlu0 %720
      %722 = vrot.lane.b32.xlu0 %v341, 56
      %v723 = vpop.permute.xlu0 %722
      %724 = vrot.lane.b32.xlu0 %v344, 56
      %v725 = vpop.permute.xlu0 %724
      %726 = vrot.lane.b32.xlu0 %v346, 56
      %v727 = vpop.permute.xlu0 %726
      %728 = vrot.lane.b32.xlu0 %v349, 56
      %v729 = vpop.permute.xlu0 %728
      %730 = vrot.lane.b32.xlu0 %v351, 56
      %v731 = vpop.permute.xlu0 %730
      %732 = vrot.lane.b32.xlu0 %v354, 56
      %v733 = vpop.permute.xlu0 %732
      %734 = vrot.lane.b32.xlu0 %v356, 56
      %v735 = vpop.permute.xlu0 %734
      %736 = vrot.lane.b32.xlu0 %v403, 56
      %v737 = vpop.permute.xlu0 %736
      %738 = vrot.lane.b32.xlu0 %v405, 56
      %v739 = vpop.permute.xlu0 %738
      %740 = vrot.lane.b32.xlu0 %v416, 56
      %v741 = vpop.permute.xlu0 %740
      %742 = vrot.lane.b32.xlu0 %v418, 56
      %v743 = vpop.permute.xlu0 %742
      %760 = vrot.lane.b32.xlu0 %v370, 64
      %v761 = vpop.permute.xlu0 %760
      %762 = vrot.lane.b32.xlu0 %v372, 64
      %v763 = vpop.permute.xlu0 %762
      %764 = vrot.lane.b32.xlu0 %v375, 64
      %v765 = vpop.permute.xlu0 %764
      %766 = vrot.lane.b32.xlu0 %v377, 64
      %v767 = vpop.permute.xlu0 %766
      %768 = vrot.lane.b32.xlu0 %v380, 64
      %v769 = vpop.permute.xlu0 %768
      %770 = vrot.lane.b32.xlu0 %v382, 64
      %v771 = vpop.permute.xlu0 %770
      %772 = vrot.lane.b32.xlu0 %v385, 64
      %v773 = vpop.permute.xlu0 %772
      %774 = vrot.lane.b32.xlu0 %v387, 64
      %v775 = vpop.permute.xlu0 %774
      %776 = vrot.lane.b32.xlu0 %v390, 64
      %v777 = vpop.permute.xlu0 %776
      %778 = vrot.lane.b32.xlu0 %v392, 64
      %v779 = vpop.permute.xlu0 %778
      %780 = vrot.lane.b32.xlu0 %v395, 64
      %v781 = vpop.permute.xlu0 %780
      %782 = vrot.lane.b32.xlu0 %v397, 64
      %v783 = vpop.permute.xlu0 %782
      %784 = vrot.lane.b32.xlu0 %v408, 64
      %v785 = vpop.permute.xlu0 %784
      %786 = vrot.lane.b32.xlu0 %v410, 64
      %v787 = vpop.permute.xlu0 %786
      %788 = vrot.lane.b32.xlu0 %v421, 64
      %v789 = vpop.permute.xlu0 %788
      %790 = vrot.lane.b32.xlu0 %v423, 64
      %v791 = vpop.permute.xlu0 %790
      %vm808 = vcmask 64512
      %v809 = vsel %vm808, %v262, %v425
      %v810 = vsel %vm808, %v263, %v427
      %v811 = vsel %vm808, %v265, %v429
      %v812 = vsel %vm808, %v266, %v431
      %v813 = vsel %vm808, %v268, %v433
      %v814 = vsel %vm808, %v269, %v435
      %v815 = vsel %vm808, %v271, %v437
      %v816 = vsel %vm808, %v272, %v439
      %v817 = vsel %vm808, %v274, %v441
      %v818 = vsel %vm808, %v275, %v443
      %v819 = vsel %vm808, %v277, %v445
      %v820 = vsel %vm808, %v278, %v447
      %v821 = vsel %vm808, %v280, %v449
      %v822 = vsel %vm808, %v281, %v451
      %v823 = vsel %vm808, %v283, %v453
      %v824 = vsel %vm808, %v284, %v455
      %vm825 = vcmask 130048
      %v826 = vsel %vm825, %v809, %v473
      %v827 = vsel %vm825, %v810, %v475
      %v828 = vsel %vm825, %v811, %v477
      %v829 = vsel %vm825, %v812, %v479
      %v830 = vsel %vm825, %v813, %v481
      %v831 = vsel %vm825, %v814, %v483
      %v832 = vsel %vm825, %v815, %v485
      %v833 = vsel %vm825, %v816, %v487
      %v834 = vsel %vm825, %v817, %v489
      %v835 = vsel %vm825, %v818, %v491
      %v836 = vsel %vm825, %v819, %v493
      %v837 = vsel %vm825, %v820, %v495
      %v838 = vsel %vm825, %v821, %v497
      %v839 = vsel %vm825, %v822, %v499
      %v840 = vsel %vm825, %v823, %v501
      %v841 = vsel %vm825, %v824, %v503
      %vm842 = vcmask 195584
      %v843 = vsel %vm842, %v826, %v521
      %v844 = vsel %vm842, %v827, %v523
      %v845 = vsel %vm842, %v828, %v525
      %v846 = vsel %vm842, %v829, %v527
      %v847 = vsel %vm842, %v830, %v529
      %v848 = vsel %vm842, %v831, %v531
      %v849 = vsel %vm842, %v832, %v533
      %v850 = vsel %vm842, %v833, %v535
      %v851 = vsel %vm842, %v834, %v537
      %v852 = vsel %vm842, %v835, %v539
      %v853 = vsel %vm842, %v836, %v541
      %v854 = vsel %vm842, %v837, %v543
      %v855 = vsel %vm842, %v838, %v545
      %v856 = vsel %vm842, %v839, %v547
      %v857 = vsel %vm842, %v840, %v549
      %v858 = vsel %vm842, %v841, %v551
      %vm859 = vcmask 261120
      %v860 = vsel %vm859, %v843, %v569
      %v861 = vsel %vm859, %v844, %v571
      %v862 = vsel %vm859, %v845, %v573
      %v863 = vsel %vm859, %v846, %v575
      %v864 = vsel %vm859, %v847, %v577
      %v865 = vsel %vm859, %v848, %v579
      %v866 = vsel %vm859, %v849, %v581
      %v867 = vsel %vm859, %v850, %v583
      %v868 = vsel %vm859, %v851, %v585
      %v869 = vsel %vm859, %v852, %v587
      %v870 = vsel %vm859, %v853, %v589
      %v871 = vsel %vm859, %v854, %v591
      %v872 = vsel %vm859, %v855, %v593
      %v873 = vsel %vm859, %v856, %v595
      %v874 = vsel %vm859, %v857, %v597
      %v875 = vsel %vm859, %v858, %v599
      %vm876 = vcmask 326656
      %v877 = vsel %vm876, %v860, %v617
      %v878 = vsel %vm876, %v861, %v619
      %v879 = vsel %vm876, %v862, %v621
      %v880 = vsel %vm876, %v863, %v623
      %v881 = vsel %vm876, %v864, %v625
      %v882 = vsel %vm876, %v865, %v627
      %v883 = vsel %vm876, %v866, %v629
      %v884 = vsel %vm876, %v867, %v631
      %v885 = vsel %vm876, %v868, %v633
      %v886 = vsel %vm876, %v869, %v635
      %v887 = vsel %vm876, %v870, %v637
      %v888 = vsel %vm876, %v871, %v639
      %v889 = vsel %vm876, %v872, %v641
      %v890 = vsel %vm876, %v873, %v643
      %v891 = vsel %vm876, %v874, %v645
      %v892 = vsel %vm876, %v875, %v647
      %vm893 = vcmask 392192
      %v894 = vsel %vm893, %v877, %v665
      %v895 = vsel %vm893, %v878, %v667
      %v896 = vsel %vm893, %v879, %v669
      %v897 = vsel %vm893, %v880, %v671
      %v898 = vsel %vm893, %v881, %v673
      %v899 = vsel %vm893, %v882, %v675
      %v900 = vsel %vm893, %v883, %v677
      %v901 = vsel %vm893, %v884, %v679
      %v902 = vsel %vm893, %v885, %v681
      %v903 = vsel %vm893, %v886, %v683
      %v904 = vsel %vm893, %v887, %v685
      %v905 = vsel %vm893, %v888, %v687
      %v906 = vsel %vm893, %v889, %v689
      %v907 = vsel %vm893, %v890, %v691
      %v908 = vsel %vm893, %v891, %v693
      %v909 = vsel %vm893, %v892, %v695
      %vm910 = vcmask 457728
      %v911 = vsel %vm910, %v894, %v713
      %v912 = vsel %vm910, %v895, %v715
      %v913 = vsel %vm910, %v896, %v717
      %v914 = vsel %vm910, %v897, %v719
      %v915 = vsel %vm910, %v898, %v721
      %v916 = vsel %vm910, %v899, %v723
      %v917 = vsel %vm910, %v900, %v725
      %v918 = vsel %vm910, %v901, %v727
      %v919 = vsel %vm910, %v902, %v729
      %v920 = vsel %vm910, %v903, %v731
      %v921 = vsel %vm910, %v904, %v733
      %v922 = vsel %vm910, %v905, %v735
      %v923 = vsel %vm910, %v906, %v737
      %v924 = vsel %vm910, %v907, %v739
      %v925 = vsel %vm910, %v908, %v741
      %v926 = vsel %vm910, %v909, %v743
      %vm927 = vcmask 523264
      %v928 = vsel %vm927, %v911, %v761
      %v929 = vsel %vm927, %v912, %v763
      %v930 = vsel %vm927, %v913, %v765
      %v931 = vsel %vm927, %v914, %v767
      %v932 = vsel %vm927, %v915, %v769
      %v933 = vsel %vm927, %v916, %v771
      %v934 = vsel %vm927, %v917, %v773
      %v935 = vsel %vm927, %v918, %v775
      %v936 = vsel %vm927, %v919, %v777
      %v937 = vsel %vm927, %v920, %v779
      %v938 = vsel %vm927, %v921, %v781
      %v939 = vsel %vm927, %v922, %v783
      %v940 = vsel %vm927, %v923, %v785
      %v941 = vsel %vm927, %v924, %v787
      %v942 = vsel %vm927, %v925, %v789
      %v943 = vsel %vm927, %v926, %v791
      %v944 = vpack.c.bf16 %v929, %v928
      %v945 = vpack.c.bf16 %v931, %v930
      %v946 = vpack.c.bf16 %v933, %v932
      %v947 = vpack.c.bf16 %v935, %v934
      %v948 = vpack.c.bf16 %v937, %v936
      %v949 = vpack.c.bf16 %v939, %v938
      %v950 = vpack.c.bf16 %v941, %v940
      %v951 = vpack.c.bf16 %v943, %v942
      %v952 = vld [vmem:[%s1] sm:$0xf]
      %v953 = vld [vmem:[%s1 + $0x4] sm:$0xf]
      %v954 = vld [vmem:[%s1 + $0x8] sm:$0xf]
      %v955 = vld [vmem:[%s1 + $0xc] sm:$0xf]
      %v956 = vld [vmem:[%s1 + $0x10] sm:$0xf]
      %v957 = vld [vmem:[%s1 + $0x14] sm:$0xf]
      %v958 = vld [vmem:[%s1 + $0x18] sm:$0xf]
      %v959 = vld [vmem:[%s1 + $0x1c] sm:$0xf]
      %v960 = vld [vmem:[%s1 + $0x20] sm:$0xf]
      %v970 = vunpack.c.l.b16 %v952
      %v971 = vunpack.c.l.b16 %v953
      %v972 = vunpack.c.l.b16 %v954
      %v973 = vunpack.c.l.b16 %v955
      %v974 = vunpack.c.l.b16 %v956
      %v975 = vunpack.c.l.b16 %v957
      %v976 = vunpack.c.l.b16 %v958
      %v977 = vunpack.c.l.b16 %v959
      %v978 = vunpack.c.l.b16 %v960
      %v979 = vpack.c.b16 %v971, %v970
      %v980 = vpack.c.b16 %v973, %v972
      %v981 = vpack.c.b16 %v975, %v974
      %v982 = vpack.c.b16 %v977, %v976
      %v983 = vpack.c.b16 %v978, %v978
      %vm988 = vcmask 588800
      %v990 = vsel %vm988, %v944, 0
      %v993 = vsel %vm988, %v945, 0
      %v996 = vsel %vm988, %v946, 0
      %v999 = vsel %vm988, %v947, 0
      %v1002 = vsel %vm988, %v948, 0
      %v1005 = vsel %vm988, %v949, 0
      %v1008 = vsel %vm988, %v950, 0
      %v1011 = vsel %vm988, %v951, 0
      %vm1013 = vcmask 1043456
      %v1015 = vsel %vm1013, %v983, 0
      %1017 = vmatprep.subr.bf16.mxu0 0
      %1018 = vmatpush1.bf16.msra.mxu0 %v979
      %1019 = vmatprep.subr.bf16.mxu0 0
      %1020 = vmatpush1.bf16.msra.mxu0 %v980
      %1021 = vmatprep.subr.bf16.mxu0 0
      %1022 = vmatpush1.bf16.msra.mxu0 %v981
      %1023 = vmatprep.subr.bf16.mxu0 0
      %1024 = vmatpush1.bf16.msra.mxu0 %v982
      %1025 = vmatprep.subr.bf16.mxu0 0
      %1026 = vmatpush1.bf16.msra.mxu0 %v1015
      %1027 = vmatprep.subr.bf16.mxu0 0
      %1028 = vmatpush1.bf16.msra.mxu0 0
      %1029 = vmatprep.subr.bf16.mxu0 0
      %1030 = vmatpush1.bf16.msra.mxu0 0
      %1031 = vmatprep.subr.bf16.mxu0 0
      %1032 = vmatpush1.bf16.msra.mxu0 0
      %1033 = vmatprep.subr.bf16.mxu0 0
      %1034 = vmatpush1.bf16.msra.mxu0 0
      %1035 = vmatprep.subr.bf16.mxu0 0
      %1036 = vmatpush1.bf16.msra.mxu0 0
      %1037 = vmatprep.subr.bf16.mxu0 0
      %1038 = vmatpush1.bf16.msra.mxu0 0
      %1039 = vmatprep.subr.bf16.mxu0 0
      %1040 = vmatpush1.bf16.msra.mxu0 0
      %1041 = vmatprep.subr.bf16.mxu0 0
      %1042 = vmatpush1.bf16.msra.mxu0 0
      %1043 = vmatprep.subr.bf16.mxu0 0
      %1044 = vmatpush1.bf16.msra.mxu0 0
      %1045 = vmatprep.subr.bf16.mxu0 0
      %1046 = vmatpush1.bf16.msra.mxu0 0
      %1047 = vmatprep.subr.bf16.mxu0 0
      %1048 = vmatpush1.bf16.msra.mxu0 0
      %1049 = vmatprep.mubr.bf16.mxu0 0
      %1050 = vmatmul.mubr.bf16.gmra.mrb[0].mxu0 %v990
      %v1051 = vpop.f32.mrb[0].mxu0
      %v1052 = vadd.f32 0.0, %v1051
      %v1053 = vpop.f32.mrb[0].mxu0
      %v1054 = vpop.f32.mrb[0].mxu0
      %v1055 = vadd.f32 0.0, %v1054
      %v1056 = vpop.f32.mrb[0].mxu0
      %1057 = vmatprep.mubr.bf16.mxu0 0
      %1058 = vmatmul.mubr.bf16.gmra.mrb[0].mxu0 %v993
      %v1059 = vpop.f32.mrb[0].mxu0
      %v1060 = vadd.f32 0.0, %v1059
      %v1061 = vpop.f32.mrb[0].mxu0
      %v1062 = vpop.f32.mrb[0].mxu0
      %v1063 = vadd.f32 0.0, %v1062
      %v1064 = vpop.f32.mrb[0].mxu0
      %1065 = vmatprep.mubr.bf16.mxu0 0
      %1066 = vmatmul.mubr.bf16.gmra.mrb[0].mxu0 %v996
      %v1067 = vpop.f32.mrb[0].mxu0
      %v1068 = vadd.f32 0.0, %v1067
      %v1069 = vpop.f32.mrb[0].mxu0
      %v1070 = vpop.f32.mrb[0].mxu0
      %v1071 = vadd.f32 0.0, %v1070
      %v1072 = vpop.f32.mrb[0].mxu0
      %1073 = vmatprep.mubr.bf16.mxu0 0
      %1074 = vmatmul.mubr.bf16.gmra.mrb[0].mxu0 %v999
      %v1075 = vpop.f32.mrb[0].mxu0
      %v1076 = vadd.f32 0.0, %v1075
      %v1077 = vpop.f32.mrb[0].mxu0
      %v1078 = vpop.f32.mrb[0].mxu0
      %v1079 = vadd.f32 0.0, %v1078
      %v1080 = vpop.f32.mrb[0].mxu0
      %1081 = vmatprep.mubr.bf16.mxu0 0
      %1082 = vmatmul.mubr.bf16.gmra.mrb[0].mxu0 %v1002
      %v1083 = vpop.f32.mrb[0].mxu0
      %v1084 = vadd.f32 0.0, %v1083
      %v1085 = vpop.f32.mrb[0].mxu0
      %v1086 = vpop.f32.mrb[0].mxu0
      %v1087 = vadd.f32 0.0, %v1086
      %v1088 = vpop.f32.mrb[0].mxu0
      %1089 = vmatprep.mubr.bf16.mxu0 0
      %1090 = vmatmul.mubr.bf16.gmra.mrb[0].mxu0 %v1005
      %v1091 = vpop.f32.mrb[0].mxu0
      %v1092 = vadd.f32 0.0, %v1091
      %v1093 = vpop.f32.mrb[0].mxu0
      %v1094 = vpop.f32.mrb[0].mxu0
      %v1095 = vadd.f32 0.0, %v1094
      %v1096 = vpop.f32.mrb[0].mxu0
      %1097 = vmatprep.mubr.bf16.mxu0 0
      %1098 = vmatmul.mubr.bf16.gmra.mrb[0].mxu0 %v1008
      %v1099 = vpop.f32.mrb[0].mxu0
      %v1100 = vadd.f32 0.0, %v1099
      %v1101 = vpop.f32.mrb[0].mxu0
      %v1102 = vpop.f32.mrb[0].mxu0
      %v1103 = vadd.f32 0.0, %v1102
      %v1104 = vpop.f32.mrb[0].mxu0
      %1105 = vmatprep.mubr.bf16.mxu0 0
      %1106 = vmatmul.mubr.bf16.gmra.mrb[0].mxu0 %v1011
      %v1107 = vpop.f32.mrb[0].mxu0
      %v1108 = vadd.f32 0.0, %v1107
      %v1109 = vpop.f32.mrb[0].mxu0
      %v1110 = vpop.f32.mrb[0].mxu0
      %v1111 = vadd.f32 0.0, %v1110
      %v1112 = vpop.f32.mrb[0].mxu0
      %1113 = vdwg.mxu0
      %1114 = vst.msk [vmem:[%s221] sm:$0xff] %vm808, %v1052
      %1115 = vst.msk [vmem:[%s221 + $0x8] sm:$0xff] %vm808, %v1055
      %1116 = vst.msk [vmem:[%s221 + $0x10] sm:$0xff] %vm808, %v1060
      %1117 = vst.msk [vmem:[%s221 + $0x18] sm:$0xff] %vm808, %v1063
      %1118 = vst.msk [vmem:[%s221 + $0x20] sm:$0xff] %vm808, %v1068
      %1119 = vst.msk [vmem:[%s221 + $0x28] sm:$0xff] %vm808, %v1071
      %1120 = vst.msk [vmem:[%s221 + $0x30] sm:$0xff] %vm808, %v1076
      %1121 = vst.msk [vmem:[%s221 + $0x38] sm:$0xff] %vm808, %v1079
      %1122 = vst.msk [vmem:[%s221 + $0x40] sm:$0xff] %vm808, %v1084
      %1123 = vst.msk [vmem:[%s221 + $0x48] sm:$0xff] %vm808, %v1087
      %1124 = vst.msk [vmem:[%s221 + $0x50] sm:$0xff] %vm808, %v1092
      %1125 = vst.msk [vmem:[%s221 + $0x58] sm:$0xff] %vm808, %v1095
      %1126 = vst.msk [vmem:[%s221 + $0x60] sm:$0xff] %vm808, %v1100
      %1127 = vst.msk [vmem:[%s221 + $0x68] sm:$0xff] %vm808, %v1103
      %1128 = vst.msk [vmem:[%s221 + $0x70] sm:$0xff] %vm808, %v1108
      %1129 = vst.msk [vmem:[%s221 + $0x78] sm:$0xff] %vm808, %v1111
      %v1130 = vsel %vm808, %v1052, 0.0
      %v1131 = vsel %vm808, %v1055, 0.0
      %v1132 = vadd.f32 %v1130, %v1131
      %v1133 = vsel %vm808, %v1060, 0.0
      %v1134 = vadd.f32 %v1132, %v1133
      %v1135 = vsel %vm808, %v1063, 0.0
      %v1136 = vadd.f32 %v1134, %v1135
      %v1137 = vsel %vm808, %v1068, 0.0
      %v1138 = vadd.f32 %v1136, %v1137
      %v1139 = vsel %vm808, %v1071, 0.0
      %v1140 = vadd.f32 %v1138, %v1139
      %v1141 = vsel %vm808, %v1076, 0.0
      %v1142 = vadd.f32 %v1140, %v1141
      %v1143 = vsel %vm808, %v1079, 0.0
      %v1144 = vadd.f32 %v1142, %v1143
      %v1145 = vsel %vm808, %v1084, 0.0
      %v1146 = vadd.f32 %v1144, %v1145
      %v1147 = vsel %vm808, %v1087, 0.0
      %v1148 = vadd.f32 %v1146, %v1147
      %v1149 = vsel %vm808, %v1092, 0.0
      %v1150 = vadd.f32 %v1148, %v1149
      %v1151 = vsel %vm808, %v1095, 0.0
      %v1152 = vadd.f32 %v1150, %v1151
      %v1153 = vsel %vm808, %v1100, 0.0
      %v1154 = vadd.f32 %v1152, %v1153
      %v1155 = vsel %vm808, %v1103, 0.0
      %v1156 = vadd.f32 %v1154, %v1155
      %v1157 = vsel %vm808, %v1108, 0.0
      %v1158 = vadd.f32 %v1156, %v1157
      %v1159 = vsel %vm808, %v1111, 0.0
      %v1160 = vadd.f32 %v1158, %v1159
      %v1161 = vrot.slane %v1160, 4
      %v1162 = vadd.f32 %v1160, %v1161
      %v1163 = vrot.slane %v1162, 2
      %v1164 = vadd.f32 %v1162, %v1163
      %v1165 = vrot.slane %v1164, 1
      %v1166 = vadd.f32 %v1164, %v1165
      %vm1167 = vcmask 57344
      %1168 = vst.msk [vmem:[%s230] sm:$0x1] %vm1167, %v1166
      %v1169 = vmul.f32 %v1052, %v1052
      %v1170 = vmul.f32 %v1055, %v1055
      %v1171 = vmul.f32 %v1060, %v1060
      %v1172 = vmul.f32 %v1063, %v1063
      %v1173 = vmul.f32 %v1068, %v1068
      %v1174 = vmul.f32 %v1071, %v1071
      %v1175 = vmul.f32 %v1076, %v1076
      %v1176 = vmul.f32 %v1079, %v1079
      %v1177 = vmul.f32 %v1084, %v1084
      %v1178 = vmul.f32 %v1087, %v1087
      %v1179 = vmul.f32 %v1092, %v1092
      %v1180 = vmul.f32 %v1095, %v1095
      %v1181 = vmul.f32 %v1100, %v1100
      %v1182 = vmul.f32 %v1103, %v1103
      %v1183 = vmul.f32 %v1108, %v1108
      %v1184 = vmul.f32 %v1111, %v1111
      %v1185 = vsel %vm808, %v1169, 0.0
      %v1186 = vsel %vm808, %v1170, 0.0
      %v1187 = vadd.f32 %v1185, %v1186
      %v1188 = vsel %vm808, %v1171, 0.0
      %v1189 = vadd.f32 %v1187, %v1188
      %v1190 = vsel %vm808, %v1172, 0.0
      %v1191 = vadd.f32 %v1189, %v1190
      %v1192 = vsel %vm808, %v1173, 0.0
      %v1193 = vadd.f32 %v1191, %v1192
      %v1194 = vsel %vm808, %v1174, 0.0
      %v1195 = vadd.f32 %v1193, %v1194
      %v1196 = vsel %vm808, %v1175, 0.0
      %v1197 = vadd.f32 %v1195, %v1196
      %v1198 = vsel %vm808, %v1176, 0.0
      %v1199 = vadd.f32 %v1197, %v1198
      %v1200 = vsel %vm808, %v1177, 0.0
      %v1201 = vadd.f32 %v1199, %v1200
      %v1202 = vsel %vm808, %v1178, 0.0
      %v1203 = vadd.f32 %v1201, %v1202
      %v1204 = vsel %vm808, %v1179, 0.0
      %v1205 = vadd.f32 %v1203, %v1204
      %v1206 = vsel %vm808, %v1180, 0.0
      %v1207 = vadd.f32 %v1205, %v1206
      %v1208 = vsel %vm808, %v1181, 0.0
      %v1209 = vadd.f32 %v1207, %v1208
      %v1210 = vsel %vm808, %v1182, 0.0
      %v1211 = vadd.f32 %v1209, %v1210
      %v1212 = vsel %vm808, %v1183, 0.0
      %v1213 = vadd.f32 %v1211, %v1212
      %v1214 = vsel %vm808, %v1184, 0.0
      %v1215 = vadd.f32 %v1213, %v1214
      %v1216 = vrot.slane %v1215, 4
      %v1217 = vadd.f32 %v1215, %v1216
      %v1218 = vrot.slane %v1217, 2
      %v1219 = vadd.f32 %v1217, %v1218
      %v1220 = vrot.slane %v1219, 1
      %v1221 = vadd.f32 %v1219, %v1220
      %1222 = vst.msk [vmem:[%s230 + $0x1] sm:$0x1] %vm1167, %v1221
      %s1223 = smul.u32 8, %s20
      %p1224 = scmp.lt.s32.totalorder %s19, 1
      %s1225 = scalar_select %p1224, %s19, 1
      %p1226 = scmp.lt.s32.totalorder %s1223, 15
      %s1227 = scalar_select %p1226, %s1223, 15
      %s1228 = smul.addr %s1227, 2
      %s1229 = smul.addr %s1225, 32
      %s1230 = sadd.s32 %s1228, %s1229
      %s1231 = smul.addr %s1230, 8
      %s1232 = scalar_lea.vmem %s2, %s1231
      %p1233 = scmp.lt.s32.totalorder %s19, 1
      %s1234 = scalar_select %p1233, %s19, 1
      %p1235 = scmp.lt.s32.totalorder %s20, 1
      %s1236 = scalar_select %p1235, %s20, 1
      %s1237 = smul.addr %s1234, 2
      %s1238 = sadd.s32 %s1236, %s1237
      %s1239 = smul.addr %s1238, 2
      %s1240 = scalar_lea.vmem %s3, %s1239
      // Predicated region
      $region29: #{basic_block_forward.4} parent=27 // pred_check
        %p1241 = pneg %p96
      $region30: #{basic_block_forward.4} parent=27 // pred_check_branch
        %1243 = sbr.rel (%p1241) target = $region32
      $region31: #{basic_block_forward.4} parent=27 // pred_region
        %s1244 = smul.u32 8, %s20
      $region32: #{basic_block_forward.4} parent=27 // pred_fallthru
        _
      // Predicated region
      $region33: #{basic_block_forward.4} parent=27 // pred_check
        %p1245 = pneg %p124
      $region34: #{basic_block_forward.4} parent=27 // pred_check_branch
        %1247 = sbr.rel (%p1245) target = $region36
      $region35: #{basic_block_forward.4} parent=27 // pred_region
        _
      $region36: #{basic_block_forward.4} parent=27 // pred_fallthru
        _
    $region28: #{basic_block_forward.4} parent=5 // pred_fallthru
      _
    %p1248 = scmp.le.s32.totalorder 2, %s10
    // Predicated region
    $region37: #{basic_block_forward.4} parent=5 // pred_check
      %p1249 = pneg %p1248
    $region38: #{basic_block_forward.4} parent=5 // pred_check_branch
      %1251 = sbr.rel (%p1249) target = $region40
    $region39: #{basic_block_forward.4} parent=5 // pred_region
      %s1252 = ssub.s32 %s10, 2
      // Predicated region
      $region41: #{basic_block_forward.4} parent=39 // pred_check
        %p1253 = pneg %p102
      $region42: #{basic_block_forward.4} parent=39 // pred_check_branch
        %1255 = sbr.rel (%p1253) target = $region44
      $region43: #{basic_block_forward.4} parent=39 // pred_region
        %s1256 = smul.u32 8, %s22
        %p1257 = scmp.lt.s32.totalorder %s21, 1
        %s1258 = scalar_select %p1257, %s21, 1
        %p1259 = scmp.lt.s32.totalorder %s1256, 15
        %s1260 = scalar_select %p1259, %s1256, 15
        %s1261 = smul.addr %s1260, 2
        %s1262 = smul.addr %s1258, 32
        %s1263 = sadd.s32 %s1261, %s1262
        %s1264 = smul.addr %s1263, 8
        %s1265 = scalar_lea.vmem %s2, %s1264
      $region44: #{basic_block_forward.4} parent=39 // pred_fallthru
        _
      // Predicated region
      $region45: #{basic_block_forward.4} parent=39 // pred_check
        %p1266 = pneg %p130
      $region46: #{basic_block_forward.4} parent=39 // pred_check_branch
        %1268 = sbr.rel (%p1266) target = $region48
      $region47: #{basic_block_forward.4} parent=39 // pred_region
        %p1269 = scmp.lt.s32.totalorder %s21, 1
        %s1270 = scalar_select %p1269, %s21, 1
        %p1271 = scmp.lt.s32.totalorder %s22, 1
        %s1272 = scalar_select %p1271, %s22, 1
        %s1273 = smul.addr %s1270, 2
        %s1274 = sadd.s32 %s1272, %s1273
        %s1275 = smul.addr %s1274, 2
        %s1276 = scalar_lea.vmem %s3, %s1275
      $region48: #{basic_block_forward.4} parent=39 // pred_fallthru
        _
    $region40: #{basic_block_forward.4} parent=5 // pred_fallthru
      _
  $region6: #{basic_block_forward.4} parent=0 // loop_footer
    %s14 = sadd.s32 1, %s10
  $region7: #{basic_block_forward.4} parent=0 // loop_footer_branch
    %9 = sbr.rel target = $region3
  $region8: #{basic_block_forward.4} parent=0 // loop_exit
    _

// kernel: basic_block_forward.7
$region0: #{basic_block_forward.7}
  #allocation0 [shape = 'u32[]', space=smem, size = 0x4, offset = 0x4, fixed_abs, tag = 'smem constant byte address 0x4 - core index']
  #allocation1 [shape = 'u32[144,128]{1,0:T(1,128)}', space=vmem, size = 0x12000, scoped, tag = 'internal scratch']
  %s0 = inlined_call_operand.vmem [shape: f32[2,16,128], index: 0, kind: input, shape index: {}]
  %s1 = inlined_call_operand.vmem [shape: f32[1,128], index: 1, kind: input, shape index: {}]
  %s2 = inlined_call_operand.vmem [shape: f32[1,128], index: 2, kind: input, shape index: {}]
  %s3 = inlined_call_operand.vmem [shape: f32[2,16,128], index: 3, kind: input, shape index: {}]
  %s4 = inlined_call_operand.vmem [shape: f32[2,16,128], index: 4, kind: output, shape index: {}]
  %s5 = sld [smem:[#allocation0]]
  $region49: #{basic_block_forward.7} parent=0
    _
  %s7 = ssub.s32 1, %s5
  %s8 = scalar_select 0, %s7, %s5
  loop: start=0, step=1, limit=6
  $region2: #{basic_block_forward.7} parent=0 // loop_pre_header
    _
  $region3: #{basic_block_forward.7} parent=0 // loop_header
    %s10 = sphi 0, %s14
    %p11 = scmp.ge.s32.totalorder %s10, 6
    %s17 = sphi 0, %s29
    %s18 = sphi 0, %s25
    %s19 = sphi 0, %s17
    %s20 = sphi 0, %s18
    %s21 = sphi 0, %s19
    %s22 = sphi 0, %s20
    %s34 = sphi 0, %s36
    %s37 = sphi 0, %s34
    %s38 = sphi 0, %s37
    %s54 = sphi 0, %s38
    %s58 = sphi 0, %s58
    %s60 = sphi 0, %s58
    %s61 = sphi 0, %s60
    %s75 = sphi 0, %s61
    %s79 = sphi 0, %s79
    %s81 = sphi 0, %s79
    %s82 = sphi 0, %s81
    %s96 = sphi 0, %s82
    %s104 = sphi 0, %s106
    %s107 = sphi 0, %s104
    %s108 = sphi 0, %s107
    %s124 = sphi 0, %s108
    %s132 = sphi 0, %s134
    %s135 = sphi 0, %s132
    %s136 = sphi 0, %s135
    %s152 = sphi 0, %s136
  $region4: #{basic_block_forward.7} parent=0 // loop_header_branch
    %13 = sbr.rel (%p11) target = $region8
  $region5: #{basic_block_forward.7} parent=0 // loop_body
    %s15 = ssub.s32 %s10, 1
    %s16 = ssub.s32 %s10, 2
    %s23 = sadd.s32 1, %s18
    %p24 = scmp.ge.s32.totalorder %s23, 2
    %s25 = scalar_select %p24, 0, %s23
    %s26 = sadd.s32 1, %s17
    %s27 = scalar_select %p24, %s26, %s17
    %p28 = scmp.ge.s32.totalorder %s27, 2
    %s29 = scalar_select %p28, 0, %s27
    %s30 = ssub.s32 %s17, %s29
    %s31 = ssub.s32 %s18, %s25
    %s32 = sor.u32 %s30, %s31
    %p33 = scmp.eq.s32.totalorder %s32, 0
    %s35 = sadd.s32 %s34, 1
    %s36 = scalar_select %p33, %s34, %s35
    %p39 = pneg %p33
    %p40 = scmp.eq.s32.totalorder %s10, 3
    %p41 = por %p39, %p40
    %p42 = scmp.ne.s32.totalorder %s34, %s37
    %p43 = scmp.eq.s32.totalorder %s10, 0
    %p44 = por %p42, %p43
    %p45 = scmp.ne.s32.totalorder %s34, %s37
    %p46 = scmp.eq.s32.totalorder %s15, 3
    %p47 = por %p45, %p46
    %p48 = scmp.ne.s32.totalorder %s37, %s38
    %p49 = scmp.eq.s32.totalorder %s15, 0
    %p50 = por %p48, %p49
    %p51 = scmp.ne.s32.totalorder %s37, %s38
    %p52 = scmp.eq.s32.totalorder %s16, 3
    %p53 = por %p51, %p52
    %p55 = scmp.ne.s32.totalorder %s38, %s54
    %p56 = scmp.eq.s32.totalorder %s16, 0
    %p57 = por %p55, %p56
    %s59 = sadd.s32 %s58, 1
    %p62 = scmp.eq.s32.totalorder %s10, 3
    %p63 = scmp.ne.s32.totalorder %s58, %s60
    %p64 = scmp.eq.s32.totalorder %s10, 0
    %p65 = por %p63, %p64
    %p66 = scmp.ne.s32.totalorder %s58, %s60
    %p67 = scmp.eq.s32.totalorder %s15, 3
    %p68 = por %p66, %p67
    %p69 = scmp.ne.s32.totalorder %s60, %s61
    %p70 = scmp.eq.s32.totalorder %s15, 0
    %p71 = por %p69, %p70
    %p72 = scmp.ne.s32.totalorder %s60, %s61
    %p73 = scmp.eq.s32.totalorder %s16, 3
    %p74 = por %p72, %p73
    %p76 = scmp.ne.s32.totalorder %s61, %s75
    %p77 = scmp.eq.s32.totalorder %s16, 0
    %p78 = por %p76, %p77
    %s80 = sadd.s32 %s79, 1
    %p83 = scmp.eq.s32.totalorder %s10, 3
    %p84 = scmp.ne.s32.totalorder %s79, %s81
    %p85 = scmp.eq.s32.totalorder %s10, 0
    %p86 = por %p84, %p85
    %p87 = scmp.ne.s32.totalorder %s79, %s81
    %p88 = scmp.eq.s32.totalorder %s15, 3
    %p89 = por %p87, %p88
    %p90 = scmp.ne.s32.totalorder %s81, %s82
    %p91 = scmp.eq.s32.totalorder %s15, 0
    %p92 = por %p90, %p91
    %p93 = scmp.ne.s32.totalorder %s81, %s82
    %p94 = scmp.eq.s32.totalorder %s16, 3
    %p95 = por %p93, %p94
    %p97 = scmp.ne.s32.totalorder %s82, %s96
    %p98 = scmp.eq.s32.totalorder %s16, 0
    %p99 = por %p97, %p98
    %s100 = ssub.s32 %s17, %s29
    %s101 = ssub.s32 %s18, %s25
    %s102 = sor.u32 %s100, %s101
    %p103 = scmp.eq.s32.totalorder %s102, 0
    %s105 = sadd.s32 %s104, 1
    %s106 = scalar_select %p103, %s104, %s105
    %p109 = pneg %p103
    %p110 = scmp.eq.s32.totalorder %s10, 3
    %p111 = por %p109, %p110
    %p112 = scmp.ne.s32.totalorder %s104, %s107
    %p113 = scmp.eq.s32.totalorder %s10, 0
    %p114 = por %p112, %p113
    %p115 = scmp.ne.s32.totalorder %s104, %s107
    %p116 = scmp.eq.s32.totalorder %s15, 3
    %p117 = por %p115, %p116
    %p118 = scmp.ne.s32.totalorder %s107, %s108
    %p119 = scmp.eq.s32.totalorder %s15, 0
    %p120 = por %p118, %p119
    %p121 = scmp.ne.s32.totalorder %s107, %s108
    %p122 = scmp.eq.s32.totalorder %s16, 3
    %p123 = por %p121, %p122
    %p125 = scmp.ne.s32.totalorder %s108, %s124
    %p126 = scmp.eq.s32.totalorder %s16, 0
    %p127 = por %p125, %p126
    %s128 = ssub.s32 %s17, %s29
    %s129 = ssub.s32 %s18, %s25
    %s130 = sor.u32 %s128, %s129
    %p131 = scmp.eq.s32.totalorder %s130, 0
    %s133 = sadd.s32 %s132, 1
    %s134 = scalar_select %p131, %s132, %s133
    %p137 = pneg %p131
    %p138 = scmp.eq.s32.totalorder %s10, 3
    %p139 = por %p137, %p138
    %p140 = scmp.ne.s32.totalorder %s132, %s135
    %p141 = scmp.eq.s32.totalorder %s10, 0
    %p142 = por %p140, %p141
    %p143 = scmp.ne.s32.totalorder %s132, %s135
    %p144 = scmp.eq.s32.totalorder %s15, 3
    %p145 = por %p143, %p144
    %p146 = scmp.ne.s32.totalorder %s135, %s136
    %p147 = scmp.eq.s32.totalorder %s15, 0
    %p148 = por %p146, %p147
    %p149 = scmp.ne.s32.totalorder %s135, %s136
    %p150 = scmp.eq.s32.totalorder %s16, 3
    %p151 = por %p149, %p150
    %p153 = scmp.ne.s32.totalorder %s136, %s152
    %p154 = scmp.eq.s32.totalorder %s16, 0
    %p155 = por %p153, %p154
    %p156 = scmp.le.s32.totalorder 1, %s10
    %p157 = scmp.lt.s32.totalorder %s10, 5
    %p158 = pnand %p156, %p157
    %p159 = pneg %p158
    // Predicated region
    $region9: #{basic_block_forward.7} parent=5 // pred_check
      _
    $region10: #{basic_block_forward.7} parent=5 // pred_check_branch
      %161 = sbr.rel (%p158) target = $region12
    $region11: #{basic_block_forward.7} parent=5 // pred_region
      %s162 = ssub.s32 %s10, 1
      // Predicated region
      $region13: #{basic_block_forward.7} parent=11 // pred_check
        %p163 = pneg %p71
      $region14: #{basic_block_forward.7} parent=11 // pred_check_branch
        %165 = sbr.rel (%p163) target = $region16
      $region15: #{basic_block_forward.7} parent=11 // pred_region
        _
      $region16: #{basic_block_forward.7} parent=11 // pred_fallthru
        _
      // Predicated region
      $region17: #{basic_block_forward.7} parent=11 // pred_check
        %p166 = pneg %p92
      $region18: #{basic_block_forward.7} parent=11 // pred_check_branch
        %168 = sbr.rel (%p166) target = $region20
      $region19: #{basic_block_forward.7} parent=11 // pred_region
        _
      $region20: #{basic_block_forward.7} parent=11 // pred_fallthru
        _
    $region12: #{basic_block_forward.7} parent=5 // pred_fallthru
      _
    %p169 = scmp.lt.s32.totalorder %s10, 4
    // Predicated region
    $region21: #{basic_block_forward.7} parent=5 // pred_check
      %p170 = pneg %p169
    $region22: #{basic_block_forward.7} parent=5 // pred_check_branch
      %172 = sbr.rel (%p170) target = $region24
    $region23: #{basic_block_forward.7} parent=5 // pred_region
      // Predicated region
      $region25: #{basic_block_forward.7} parent=23 // pred_check
        %p173 = pneg %p44
      $region26: #{basic_block_forward.7} parent=23 // pred_check_branch
        %175 = sbr.rel (%p173) target = $region28
      $region27: #{basic_block_forward.7} parent=23 // pred_region
        %p176 = scmp.lt.s32.totalorder %s17, 1
        %s177 = scalar_select %p176, %s17, 1
        %p178 = scmp.lt.s32.totalorder %s18, 1
        %s179 = scalar_select %p178, %s18, 1
        %s180 = smul.addr %s177, 2
        %s181 = sadd.s32 %s179, %s180
        %s182 = smul.addr %s181, 8
        %s183 = scalar_lea.vmem %s0, %s182
      $region28: #{basic_block_forward.7} parent=23 // pred_fallthru
        _
      // Predicated region
      $region29: #{basic_block_forward.7} parent=23 // pred_check
        %p184 = pneg %p114
      $region30: #{basic_block_forward.7} parent=23 // pred_check_branch
        %186 = sbr.rel (%p184) target = $region32
      $region31: #{basic_block_forward.7} parent=23 // pred_region
        %p187 = scmp.lt.s32.totalorder %s17, 1
        %s188 = scalar_select %p187, %s17, 1
        %p189 = scmp.lt.s32.totalorder %s18, 1
        %s190 = scalar_select %p189, %s18, 1
        %s191 = smul.addr %s188, 2
        %s192 = sadd.s32 %s190, %s191
        %s193 = smul.addr %s192, 8
        %s194 = scalar_lea.vmem %s3, %s193
      $region32: #{basic_block_forward.7} parent=23 // pred_fallthru
        _
    $region24: #{basic_block_forward.7} parent=5 // pred_fallthru
      _
    %p195 = scmp.le.s32.totalorder 1, %s10
    %p196 = scmp.lt.s32.totalorder %s10, 5
    %p197 = pnand %p195, %p196
    %p198 = pneg %p197
    // Predicated region
    $region33: #{basic_block_forward.7} parent=5 // pred_check
      _
    $region34: #{basic_block_forward.7} parent=5 // pred_check_branch
      %200 = sbr.rel (%p197) target = $region36
    $region35: #{basic_block_forward.7} parent=5 // pred_region
      %s201 = ssub.s32 %s10, 1
      %p202 = scmp.lt.s32.totalorder %s19, 1
      %s203 = scalar_select %p202, %s19, 1
      %p204 = scmp.lt.s32.totalorder %s20, 1
      %s205 = scalar_select %p204, %s20, 1
      %s206 = smul.addr %s203, 2
      %s207 = sadd.s32 %s205, %s206
      %s208 = smul.addr %s207, 8
      %s209 = scalar_lea.vmem %s0, %s208
      %p210 = pneg %p50
      %p211 = pneg %p47
      %p212 = pneg %p71
      %p213 = pneg %p68
      %p214 = pneg %p92
      %p215 = pneg %p89
      %p216 = scmp.lt.s32.totalorder %s19, 1
      %s217 = scalar_select %p216, %s19, 1
      %p218 = scmp.lt.s32.totalorder %s20, 1
      %s219 = scalar_select %p218, %s20, 1
      %s220 = smul.addr %s217, 2
      %s221 = sadd.s32 %s219, %s220
      %s222 = smul.addr %s221, 8
      %s223 = scalar_lea.vmem %s3, %s222
      %p224 = pneg %p120
      %p225 = pneg %p117
      %p226 = pneg %p148
      %p227 = pneg %p145
      %p228 = scmp.lt.s32.totalorder %s19, 1
      %s229 = scalar_select %p228, %s19, 1
      %p230 = scmp.lt.s32.totalorder %s20, 1
      %s231 = scalar_select %p230, %s20, 1
      %s232 = smul.addr %s229, 2
      %s233 = sadd.s32 %s231, %s232
      %s234 = smul.addr %s233, 8
      %s235 = scalar_lea.vmem %s4, %s234
      %p236 = scmp.lt.s32.totalorder %s19, 1
      %s237 = scalar_select %p236, %s19, 1
      %p238 = scmp.lt.s32.totalorder %s20, 1
      %s239 = scalar_select %p238, %s20, 1
      %s240 = smul.addr %s237, 2
      %s241 = sadd.s32 %s239, %s240
      %s242 = smul.addr %s241, 8
      %s243 = scalar_lea.vmem %s0, %s242
      %p244 = scmp.lt.s32.totalorder %s19, 1
      %s245 = scalar_select %p244, %s19, 1
      %p246 = scmp.lt.s32.totalorder %s20, 1
      %s247 = scalar_select %p246, %s20, 1
      %s248 = smul.addr %s245, 2
      %s249 = sadd.s32 %s247, %s248
      %s250 = smul.addr %s249, 8
      %s251 = scalar_lea.vmem %s3, %s250
      %p252 = scmp.lt.s32.totalorder %s19, 1
      %s253 = scalar_select %p252, %s19, 1
      %p254 = scmp.lt.s32.totalorder %s20, 1
      %s255 = scalar_select %p254, %s20, 1
      %s256 = smul.addr %s253, 2
      %s257 = sadd.s32 %s255, %s256
      %s258 = smul.addr %s257, 8
      %s259 = scalar_lea.vmem %s4, %s258
      %v260 = vld [vmem:[%s243] sm:$0xff]
      %v261 = vld [vmem:[%s1] sm:$0x1]
      %v263 = vlaneseq
      %v264 = vshrl.u32 %v263, 7
      %v265 = vsub.s32 0, %v264
      %v266 = vrot.slane %v261, %v265
      %v268 = vmul.f32 %v260, %v266
      %v269 = vld [vmem:[%s2] sm:$0x1]
      %v271 = vlaneseq
      %v272 = vshrl.u32 %v271, 7
      %v273 = vsub.s32 0, %v272
      %v274 = vrot.slane %v269, %v273
      %v276 = vadd.f32 %v268, %v274
      %v277 = vld [vmem:[%s251] sm:$0xff]
      %v278 = vadd.f32 %v276, %v277
      %v279 = vmax.f32 %v278, 0.0
      %280 = vst [vmem:[%s259] sm:$0xff] %v279
      %p281 = scmp.lt.s32.totalorder %s19, 1
      %s282 = scalar_select %p281, %s19, 1
      %p283 = scmp.lt.s32.totalorder %s20, 1
      %s284 = scalar_select %p283, %s20, 1
      %s285 = smul.addr %s282, 2
      %s286 = sadd.s32 %s284, %s285
      %s287 = smul.addr %s286, 8
      %s288 = scalar_lea.vmem %s4, %s287
      // Predicated region
      $region37: #{basic_block_forward.7} parent=35 // pred_check
        %p289 = pneg %p145
      $region38: #{basic_block_forward.7} parent=35 // pred_check_branch
        %291 = sbr.rel (%p289) target = $region40
      $region39: #{basic_block_forward.7} parent=35 // pred_region
        _
      $region40: #{basic_block_forward.7} parent=35 // pred_fallthru
        _
    $region36: #{basic_block_forward.7} parent=5 // pred_fallthru
      _
    %p292 = scmp.le.s32.totalorder 2, %s10
    // Predicated region
    $region41: #{basic_block_forward.7} parent=5 // pred_check
      %p293 = pneg %p292
    $region42: #{basic_block_forward.7} parent=5 // pred_check_branch
      %295 = sbr.rel (%p293) target = $region44
    $region43: #{basic_block_forward.7} parent=5 // pred_region
      %s296 = ssub.s32 %s10, 2
      // Predicated region
      $region45: #{basic_block_forward.7} parent=43 // pred_check
        %p297 = pneg %p151
      $region46: #{basic_block_forward.7} parent=43 // pred_check_branch
        %299 = sbr.rel (%p297) target = $region48
      $region47: #{basic_block_forward.7} parent=43 // pred_region
        %p300 = scmp.lt.s32.totalorder %s21, 1
        %s301 = scalar_select %p300, %s21, 1
        %p302 = scmp.lt.s32.totalorder %s22, 1
        %s303 = scalar_select %p302, %s22, 1
        %s304 = smul.addr %s301, 2
        %s305 = sadd.s32 %s303, %s304
        %s306 = smul.addr %s305, 8
        %s307 = scalar_lea.vmem %s4, %s306
      $region48: #{basic_block_forward.7} parent=43 // pred_fallthru
        _
    $region44: #{basic_block_forward.7} parent=5 // pred_fallthru
      _
  $region6: #{basic_block_forward.7} parent=0 // loop_footer
    %s14 = sadd.s32 1, %s10
  $region7: #{basic_block_forward.7} parent=0 // loop_footer_branch
    %9 = sbr.rel target = $region3
  $region8: #{basic_block_forward.7} parent=0 // loop_exit
    _

</llo_original>
